<compile_context>
chip_gen: v5e
topology: v5e:2x2
jax: 0.10.0
libtpu: 0.0.40
codegen_flags: <defaults>
</compile_context>

<pallas_src>
import functools

import jax
import jax.numpy as jnp
from jax.experimental import pallas as pl
from jax.experimental.pallas import tpu as pltpu


def _round_up(x, m):
    return ((x + m - 1) // m) * m


# ----------------------------------------------------------------------------
# Fused single-K-step GEMM kernel:  out = act(x @ w + b)
# ----------------------------------------------------------------------------
def _fused_matmul_kernel(x_ref, w_ref, b_ref, o_ref, *, activation, n_cls,
                         negative_slope):
    # Whole reduction in one MXU pass (bf16 operands, f32 accumulation).
    z = jnp.dot(x_ref[...], w_ref[...],
                preferred_element_type=jnp.float32) + b_ref[...]

    if activation == "leaky_relu":
        z = jnp.where(z > 0, z, negative_slope * z)
    elif activation == "heads":
        # Column 0 -> sigmoid (validity); columns 1..n_cls -> log_softmax
        # (classifier).  Padded columns hold meaningless values and are
        # sliced off by the caller.
        col = jax.lax.broadcasted_iota(jnp.int32, z.shape, 1)
        # Numerically-stable sigmoid (no exp overflow for very negative z).
        e = jnp.exp(-jnp.abs(z))
        sig = jnp.where(z >= 0, 1.0 / (1.0 + e), e / (1.0 + e))
        valid = (col >= 1) & (col <= n_cls)
        zm = jnp.where(valid, z, -jnp.inf)
        m = jnp.max(zm, axis=-1, keepdims=True)
        lse = m + jnp.log(jnp.sum(jnp.exp(zm - m), axis=-1, keepdims=True))
        z = jnp.where(col == 0, sig, z - lse)
    # activation == "linear": pass through

    o_ref[...] = z.astype(o_ref.dtype)


def fused_matmul(x, wp, bp, *, out_n, activation="linear", n_cls=None,
                 negative_slope=0.2):
    """act(x @ w + b) as one tiled Pallas MXU matmul with a fused epilogue.

    x:  (M, K) f32 (cast to bf16 here)
    wp: (Kp, Np) bf16, pre-padded GEMM-layout weight (Kp, Np multiples of 128)
    bp: (1, Np) f32, pre-padded bias
    Returns (M, out_n) f32.
    """
    M, K = x.shape
    Kp, Np = wp.shape
    assert Kp >= K and Kp % 128 == 0 and Np % 128 == 0
    assert bp.shape == (1, Np)
    assert out_n <= Np

    # One K step and one N tile per layer for this model (K <= 1024, N <= 128):
    # no accumulator scratch needed, grid is 1-D over M tiles.
    Mp8 = _round_up(M, 8)
    if Mp8 >= 256:
        tm = 128
    elif Mp8 >= 16 and (Mp8 // 2) % 8 == 0:
        tm = Mp8 // 2          # >= 2 grid steps so both v7x TensorCores get work
    else:
        tm = Mp8
    Mp = _round_up(M, tm)

    xp = jnp.pad(x, ((0, Mp - M), (0, Kp - K))).astype(jnp.bfloat16)

    kernel = functools.partial(_fused_matmul_kernel, activation=activation,
                               n_cls=n_cls, negative_slope=negative_slope)

    out = pl.pallas_call(
        kernel,
        out_shape=jax.ShapeDtypeStruct((Mp, Np), jnp.float32),
        grid_spec=pltpu.PrefetchScalarGridSpec(
            num_scalar_prefetch=0,
            grid=(Mp // tm,),
            in_specs=[
                pl.BlockSpec((tm, Kp), lambda i: (i, 0)),
                pl.BlockSpec((Kp, Np), lambda i: (0, 0)),
                pl.BlockSpec((1, Np), lambda i: (0, 0)),
            ],
            out_specs=pl.BlockSpec((tm, Np), lambda i: (i, 0)),
        ),
        compiler_params=pltpu.CompilerParams(
            dimension_semantics=("parallel",)),
    )(xp, wp, bp)

    return out[:M, :out_n]


# ----------------------------------------------------------------------------
# Weight preparation (done once, cached): GEMM layout + pad + bf16 cast.
# ----------------------------------------------------------------------------
def _prepare_gemm_weights(w2, b):
    """w2: (K, N) f32, b: (N,) f32 -> (bf16 (Kp, Np), f32 (1, Np))."""
    K, N = w2.shape
    Kp, Np = _round_up(K, 128), _round_up(N, 128)
    wp = jnp.pad(w2.astype(jnp.float32), ((0, Kp - K), (0, Np - N)))
    bp = jnp.pad(b.astype(jnp.float32), (0, Np - N)).reshape(1, Np)
    return wp.astype(jnp.bfloat16), bp


# ----------------------------------------------------------------------------
# Conv2d(k=5, s=2, p=2) + LeakyReLU as NHWC im2col + fused GEMM
# ----------------------------------------------------------------------------
def conv2d_leaky_relu_nhwc(x_nhwc, wp, bp, cout, *, kernel_size=5, stride=2,
                           padding=2, negative_slope=0.2):
    """x_nhwc: (B, H, W, C) -> (B, OH, OW, cout). Weights pre-padded (GEMM layout)."""
    B, H, W, C = x_nhwc.shape
    KH = KW = kernel_size
    OH = (H + 2 * padding - KH) // stride + 1
    OW = (W + 2 * padding - KW) // stride + 1

    xp = jnp.pad(x_nhwc, ((0, 0), (padding, padding), (padding, padding), (0, 0)))

    # im2col in NHWC: strided slices stacked on a new minor axis produce the
    # (c, kh, kw)-ordered patch matrix directly — no 6-D transpose.  Pure data
    # movement; all FLOPs run in the Pallas GEMM.
    cols = [xp[:, kh: kh + stride * (OH - 1) + 1: stride,
                  kw: kw + stride * (OW - 1) + 1: stride, :]
            for kh in range(KH) for kw in range(KW)]
    patches = jnp.stack(cols, axis=-1).reshape(B * OH * OW, C * KH * KW)

    out = fused_matmul(patches, wp, bp, out_n=cout, activation="leaky_relu",
                       negative_slope=negative_slope)      # (B*OH*OW, cout)
    return out.reshape(B, OH, OW, cout)


# ----------------------------------------------------------------------------
# Full forward (jitted): 3 convs + one fused-heads GEMM = 4 pallas_calls.
# ----------------------------------------------------------------------------
def _discriminator_forward(prepared, x, *, couts, n_paths_G, negative_slope):
    y = jnp.transpose(x, (0, 2, 3, 1))                  # NCHW -> NHWC, once
    for (wp, bp), cout in zip(prepared["convs"], couts):
        y = conv2d_leaky_relu_nhwc(y, wp, bp, cout,
                                   negative_slope=negative_slope)
    B = y.shape[0]
    # torch flattens NCHW with x.view(B, -1); tiny transpose back then flatten.
    feat = jnp.transpose(y, (0, 3, 1, 2)).reshape(B, -1)

    hw, hb = prepared["heads"]
    out = fused_matmul(feat, hw, hb, out_n=1 + n_paths_G,
                       activation="heads", n_cls=n_paths_G)
    validity = out[:, :1]
    classifier = out[:, 1:1 + n_paths_G]
    return validity, classifier


# ----------------------------------------------------------------------------
# Discriminator module
# ----------------------------------------------------------------------------
class Discriminator:
    def __init__(self, key, *, channels=3, nf=16, n_paths_G=4,
                 kernel_size=5, img_size=32):
        self.negative_slope = 0.2
        self.n_paths_G = n_paths_G
        ks = jax.random.split(key, 8)
        chans = [channels, nf, 2 * nf, 4 * nf]

        convs = []
        for li in range(3):
            cin, cout = chans[li], chans[li + 1]
            fan_in = cin * kernel_size * kernel_size
            w = jax.random.normal(ks[2 * li],
                                  (cout, cin, kernel_size, kernel_size),
                                  jnp.float32) / jnp.sqrt(float(fan_in))
            b = 0.01 * jax.random.normal(ks[2 * li + 1], (cout,), jnp.float32)
            convs.append((w, b))

        self.total_units = (4 * nf) * (img_size // 8) * (img_size // 8)
        wv = jax.random.normal(ks[6], (self.total_units, 1), jnp.float32) \
            / jnp.sqrt(float(self.total_units))
        bv = jnp.zeros((1,), jnp.float32)
        wc = jax.random.normal(ks[7], (self.total_units, n_paths_G), jnp.float32) \
            / jnp.sqrt(float(self.total_units))
        bc = jnp.zeros((n_paths_G,), jnp.float32)

        # Raw f32 params (for the pure-JAX reference).
        self.params = {"convs": convs, "validity": (wv, bv),
                       "classifier": (wc, bc)}

        # Cached GEMM-layout weights: reshape -> transpose -> pad -> bf16, once.
        prepared_convs = []
        couts = []
        for (w, b) in convs:
            cout = w.shape[0]
            w2 = w.reshape(cout, -1).T                   # (Cin*KH*KW, Cout)
            prepared_convs.append(_prepare_gemm_weights(w2, b))
            couts.append(cout)
        # Both heads fused into one GEMM: [wv | wc], [bv | bc].
        w_heads = jnp.concatenate([wv, wc], axis=1)      # (K, 1 + n_paths_G)
        b_heads = jnp.concatenate([bv, bc], axis=0)
        prepared_heads = _prepare_gemm_weights(w_heads, b_heads)

        self.prepared = {"convs": prepared_convs, "heads": prepared_heads}
        self._fwd = jax.jit(functools.partial(
            _discriminator_forward, couts=tuple(couts), n_paths_G=n_paths_G,
            negative_slope=self.negative_slope))

    def __call__(self, x):
        return self._fwd(self.prepared, x)


# ----------------------------------------------------------------------------
# Pure-JAX reference for correctness checking
# ----------------------------------------------------------------------------
def _reference_forward(params, x, negative_slope=0.2):
    y = x
    for (w, b) in params["convs"]:
        y = jax.lax.conv_general_dilated(
            y, w, window_strides=(2, 2), padding=((2, 2), (2, 2)),
            dimension_numbers=("NCHW", "OIHW", "NCHW"))
        y = y + b[None, :, None, None]
        y = jnp.where(y > 0, y, negative_slope * y)
    feat = y.reshape(y.shape[0], -1)
    wv, bv = params["validity"]
    wc, bc = params["classifier"]
    validity = jax.nn.sigmoid(feat @ wv + bv)
    classifier = jax.nn.log_softmax(feat @ wc + bc, axis=1)
    return validity, classifier


if __name__ == "__main__":
    key = jax.random.PRNGKey(0)
    k_x, k_params = jax.random.split(key)

    batch, channels, nf, n_paths_G = 2, 3, 16, 4
    x = jax.random.normal(k_x, (batch, channels, 32, 32), dtype=jnp.float32)

    model = Discriminator(k_params, channels=channels, nf=nf,
                          n_paths_G=n_paths_G)
    validity, classifier = model(x)
    validity, classifier = jax.block_until_ready((validity, classifier))

    # Shape / range / normalization sanity checks.
    assert validity.shape == (batch, 1)
    assert classifier.shape == (batch, n_paths_G)
    assert bool(jnp.all((validity > 0.0) & (validity < 1.0)))
    assert bool(jnp.allclose(jnp.sum(jnp.exp(classifier), axis=1), 1.0, atol=1e-3))

    # Numerical check against a pure-JAX reference of the same forward pass
    # (bf16 MXU operands => slightly looser tolerance than pure f32).
    ref_v, ref_c = _reference_forward(model.params, x)
    assert bool(jnp.allclose(validity, ref_v, atol=5e-2, rtol=5e-2))
    assert bool(jnp.allclose(classifier, ref_c, atol=5e-2, rtol=5e-2))

    print("KERNEL_OK")
</pallas_src>

<mosaic_0001>
module attributes {stable_mosaic.version = 11 : i64} {
  func.func @_fused_matmul_kernel(%arg0: i32, %arg1: memref<128x128xbf16, #tpu.memory_space<vmem>>, %arg2: memref<128x128xbf16, #tpu.memory_space<vmem>>, %arg3: memref<1x128xf32, #tpu.memory_space<vmem>>, %arg4: memref<128x128xf32, #tpu.memory_space<vmem>>) attributes {dimension_semantics = [#tpu.dimension_semantics<parallel>], iteration_bounds = array<i64: 4>, scalar_prefetch = 0 : i64, scratch_operands = 0 : i64, tpu.core_type = #tpu.core_type<tc>, window_params = [{transform_indices = @transform_0, window_bounds = array<i64: 128, 128>}, {pipeline_mode = #tpu.pipeline_mode<synchronous>, transform_indices = @transform_1, window_bounds = array<i64: 128, 128>}, {pipeline_mode = #tpu.pipeline_mode<synchronous>, transform_indices = @transform_2, window_bounds = array<i64: 1, 128>}, {transform_indices = @transform_3, window_bounds = array<i64: 128, 128>}]} {
    %c0 = arith.constant 0 : index
    %c0_0 = arith.constant 0 : index
    %0 = vector.load %arg1[%c0, %c0_0] : memref<128x128xbf16, #tpu.memory_space<vmem>>, vector<128x128xbf16>
    %c0_1 = arith.constant 0 : index
    %c0_2 = arith.constant 0 : index
    %1 = vector.load %arg2[%c0_1, %c0_2] : memref<128x128xbf16, #tpu.memory_space<vmem>>, vector<128x128xbf16>
    %cst = arith.constant dense<0.000000e+00> : vector<128x128xf32>
    %2 = tpu.matmul %0, %1, %cst {dimension_numbers = #tpu.dot_dimension_numbers<[1], [0], [0], [1], [0, 0, 1, 1], [], []>} : vector<128x128xbf16>, vector<128x128xbf16>, vector<128x128xf32> -> vector<128x128xf32>
    %c0_3 = arith.constant 0 : index
    %c0_4 = arith.constant 0 : index
    %3 = vector.load %arg3[%c0_3, %c0_4] : memref<1x128xf32, #tpu.memory_space<vmem>>, vector<1x128xf32>
    %4 = vector.broadcast %3 : vector<1x128xf32> to vector<128x128xf32>
    %5 = arith.addf %2, %4 : vector<128x128xf32>
    %cst_5 = arith.constant 0.000000e+00 : f32
    %6 = vector.broadcast %cst_5 : f32 to vector<128x128xf32>
    %7 = arith.cmpf ogt, %5, %6 : vector<128x128xf32>
    %cst_6 = arith.constant 2.000000e-01 : f32
    %8 = vector.broadcast %cst_6 : f32 to vector<128x128xf32>
    %9 = arith.mulf %8, %5 : vector<128x128xf32>
    %10 = arith.select %7, %5, %9 : vector<128x128xi1>, vector<128x128xf32>
    %c0_7 = arith.constant 0 : index
    %c0_8 = arith.constant 0 : index
    %11 = vector.load %arg4[%c0_7, %c0_8] : memref<128x128xf32, #tpu.memory_space<vmem>>, vector<128x128xf32>
    tpu.vector_store %arg4[%c0_7, %c0_8], %10 {strides = array<i32>} : memref<128x128xf32, #tpu.memory_space<vmem>>, vector<128x128xf32>,
    return
  }
  func.func @transform_0(%arg0: i32) -> (i32, i32) {
    %c0_i32 = arith.constant 0 : i32
    %c0_i32_0 = arith.constant 0 : i32
    return %arg0, %c0_i32 : i32, i32
  }
  func.func @transform_1(%arg0: i32) -> (i32, i32) {
    %c0_i32 = arith.constant 0 : i32
    %c0_i32_0 = arith.constant 0 : i32
    %c0_i32_1 = arith.constant 0 : i32
    return %c0_i32, %c0_i32_0 : i32, i32
  }
  func.func @transform_2(%arg0: i32) -> (i32, i32) {
    %c0_i32 = arith.constant 0 : i32
    %c0_i32_0 = arith.constant 0 : i32
    %c0_i32_1 = arith.constant 0 : i32
    return %c0_i32, %c0_i32_0 : i32, i32
  }
  func.func @transform_3(%arg0: i32) -> (i32, i32) {
    %c0_i32 = arith.constant 0 : i32
    %c0_i32_0 = arith.constant 0 : i32
    return %arg0, %c0_i32 : i32, i32
  }
}

module attributes {stable_mosaic.version = 11 : i64} {
  func.func @_fused_matmul_kernel(%arg0: i32, %arg1: memref<64x512xbf16, #tpu.memory_space<vmem>>, %arg2: memref<512x128xbf16, #tpu.memory_space<vmem>>, %arg3: memref<1x128xf32, #tpu.memory_space<vmem>>, %arg4: memref<64x128xf32, #tpu.memory_space<vmem>>) attributes {dimension_semantics = [#tpu.dimension_semantics<parallel>], iteration_bounds = array<i64: 2>, scalar_prefetch = 0 : i64, scratch_operands = 0 : i64, tpu.core_type = #tpu.core_type<tc>, window_params = [{transform_indices = @transform_0, window_bounds = array<i64: 64, 512>}, {pipeline_mode = #tpu.pipeline_mode<synchronous>, transform_indices = @transform_1, window_bounds = array<i64: 512, 128>}, {pipeline_mode = #tpu.pipeline_mode<synchronous>, transform_indices = @transform_2, window_bounds = array<i64: 1, 128>}, {transform_indices = @transform_3, window_bounds = array<i64: 64, 128>}]} {
    %c0 = arith.constant 0 : index
    %c0_0 = arith.constant 0 : index
    %0 = vector.load %arg1[%c0, %c0_0] : memref<64x512xbf16, #tpu.memory_space<vmem>>, vector<64x512xbf16>
    %c0_1 = arith.constant 0 : index
    %c0_2 = arith.constant 0 : index
    %1 = vector.load %arg2[%c0_1, %c0_2] : memref<512x128xbf16, #tpu.memory_space<vmem>>, vector<512x128xbf16>
    %cst = arith.constant dense<0.000000e+00> : vector<64x128xf32>
    %2 = tpu.matmul %0, %1, %cst {dimension_numbers = #tpu.dot_dimension_numbers<[1], [0], [0], [1], [0, 0, 1, 1], [], []>} : vector<64x512xbf16>, vector<512x128xbf16>, vector<64x128xf32> -> vector<64x128xf32>
    %c0_3 = arith.constant 0 : index
    %c0_4 = arith.constant 0 : index
    %3 = vector.load %arg3[%c0_3, %c0_4] : memref<1x128xf32, #tpu.memory_space<vmem>>, vector<1x128xf32>
    %4 = vector.broadcast %3 : vector<1x128xf32> to vector<64x128xf32>
    %5 = arith.addf %2, %4 : vector<64x128xf32>
    %cst_5 = arith.constant 0.000000e+00 : f32
    %6 = vector.broadcast %cst_5 : f32 to vector<64x128xf32>
    %7 = arith.cmpf ogt, %5, %6 : vector<64x128xf32>
    %cst_6 = arith.constant 2.000000e-01 : f32
    %8 = vector.broadcast %cst_6 : f32 to vector<64x128xf32>
    %9 = arith.mulf %8, %5 : vector<64x128xf32>
    %10 = arith.select %7, %5, %9 : vector<64x128xi1>, vector<64x128xf32>
    %c0_7 = arith.constant 0 : index
    %c0_8 = arith.constant 0 : index
    %11 = vector.load %arg4[%c0_7, %c0_8] : memref<64x128xf32, #tpu.memory_space<vmem>>, vector<64x128xf32>
    tpu.vector_store %arg4[%c0_7, %c0_8], %10 {strides = array<i32>} : memref<64x128xf32, #tpu.memory_space<vmem>>, vector<64x128xf32>,
    return
  }
  func.func @transform_0(%arg0: i32) -> (i32, i32) {
    %c0_i32 = arith.constant 0 : i32
    %c0_i32_0 = arith.constant 0 : i32
    return %arg0, %c0_i32 : i32, i32
  }
  func.func @transform_1(%arg0: i32) -> (i32, i32) {
    %c0_i32 = arith.constant 0 : i32
    %c0_i32_0 = arith.constant 0 : i32
    %c0_i32_1 = arith.constant 0 : i32
    return %c0_i32, %c0_i32_0 : i32, i32
  }
  func.func @transform_2(%arg0: i32) -> (i32, i32) {
    %c0_i32 = arith.constant 0 : i32
    %c0_i32_0 = arith.constant 0 : i32
    %c0_i32_1 = arith.constant 0 : i32
    return %c0_i32, %c0_i32_0 : i32, i32
  }
  func.func @transform_3(%arg0: i32) -> (i32, i32) {
    %c0_i32 = arith.constant 0 : i32
    %c0_i32_0 = arith.constant 0 : i32
    return %arg0, %c0_i32 : i32, i32
  }
}

module attributes {stable_mosaic.version = 11 : i64} {
  func.func @_fused_matmul_kernel(%arg0: i32, %arg1: memref<16x896xbf16, #tpu.memory_space<vmem>>, %arg2: memref<896x128xbf16, #tpu.memory_space<vmem>>, %arg3: memref<1x128xf32, #tpu.memory_space<vmem>>, %arg4: memref<16x128xf32, #tpu.memory_space<vmem>>) attributes {dimension_semantics = [#tpu.dimension_semantics<parallel>], iteration_bounds = array<i64: 2>, scalar_prefetch = 0 : i64, scratch_operands = 0 : i64, tpu.core_type = #tpu.core_type<tc>, window_params = [{transform_indices = @transform_0, window_bounds = array<i64: 16, 896>}, {pipeline_mode = #tpu.pipeline_mode<synchronous>, transform_indices = @transform_1, window_bounds = array<i64: 896, 128>}, {pipeline_mode = #tpu.pipeline_mode<synchronous>, transform_indices = @transform_2, window_bounds = array<i64: 1, 128>}, {transform_indices = @transform_3, window_bounds = array<i64: 16, 128>}]} {
    %c0 = arith.constant 0 : index
    %c0_0 = arith.constant 0 : index
    %0 = vector.load %arg1[%c0, %c0_0] : memref<16x896xbf16, #tpu.memory_space<vmem>>, vector<16x896xbf16>
    %c0_1 = arith.constant 0 : index
    %c0_2 = arith.constant 0 : index
    %1 = vector.load %arg2[%c0_1, %c0_2] : memref<896x128xbf16, #tpu.memory_space<vmem>>, vector<896x128xbf16>
    %cst = arith.constant dense<0.000000e+00> : vector<16x128xf32>
    %2 = tpu.matmul %0, %1, %cst {dimension_numbers = #tpu.dot_dimension_numbers<[1], [0], [0], [1], [0, 0, 1, 1], [], []>} : vector<16x896xbf16>, vector<896x128xbf16>, vector<16x128xf32> -> vector<16x128xf32>
    %c0_3 = arith.constant 0 : index
    %c0_4 = arith.constant 0 : index
    %3 = vector.load %arg3[%c0_3, %c0_4] : memref<1x128xf32, #tpu.memory_space<vmem>>, vector<1x128xf32>
    %4 = vector.broadcast %3 : vector<1x128xf32> to vector<16x128xf32>
    %5 = arith.addf %2, %4 : vector<16x128xf32>
    %cst_5 = arith.constant 0.000000e+00 : f32
    %6 = vector.broadcast %cst_5 : f32 to vector<16x128xf32>
    %7 = arith.cmpf ogt, %5, %6 : vector<16x128xf32>
    %cst_6 = arith.constant 2.000000e-01 : f32
    %8 = vector.broadcast %cst_6 : f32 to vector<16x128xf32>
    %9 = arith.mulf %8, %5 : vector<16x128xf32>
    %10 = arith.select %7, %5, %9 : vector<16x128xi1>, vector<16x128xf32>
    %c0_7 = arith.constant 0 : index
    %c0_8 = arith.constant 0 : index
    %11 = vector.load %arg4[%c0_7, %c0_8] : memref<16x128xf32, #tpu.memory_space<vmem>>, vector<16x128xf32>
    tpu.vector_store %arg4[%c0_7, %c0_8], %10 {strides = array<i32>} : memref<16x128xf32, #tpu.memory_space<vmem>>, vector<16x128xf32>,
    return
  }
  func.func @transform_0(%arg0: i32) -> (i32, i32) {
    %c0_i32 = arith.constant 0 : i32
    %c0_i32_0 = arith.constant 0 : i32
    return %arg0, %c0_i32 : i32, i32
  }
  func.func @transform_1(%arg0: i32) -> (i32, i32) {
    %c0_i32 = arith.constant 0 : i32
    %c0_i32_0 = arith.constant 0 : i32
    %c0_i32_1 = arith.constant 0 : i32
    return %c0_i32, %c0_i32_0 : i32, i32
  }
  func.func @transform_2(%arg0: i32) -> (i32, i32) {
    %c0_i32 = arith.constant 0 : i32
    %c0_i32_0 = arith.constant 0 : i32
    %c0_i32_1 = arith.constant 0 : i32
    return %c0_i32, %c0_i32_0 : i32, i32
  }
  func.func @transform_3(%arg0: i32) -> (i32, i32) {
    %c0_i32 = arith.constant 0 : i32
    %c0_i32_0 = arith.constant 0 : i32
    return %arg0, %c0_i32 : i32, i32
  }
}

module attributes {stable_mosaic.version = 11 : i64} {
  func.func @_fused_matmul_kernel(%arg0: i32, %arg1: memref<8x1024xbf16, #tpu.memory_space<vmem>>, %arg2: memref<1024x128xbf16, #tpu.memory_space<vmem>>, %arg3: memref<1x128xf32, #tpu.memory_space<vmem>>, %arg4: memref<8x128xf32, #tpu.memory_space<vmem>>) attributes {dimension_semantics = [#tpu.dimension_semantics<parallel>], iteration_bounds = array<i64: 1>, scalar_prefetch = 0 : i64, scratch_operands = 0 : i64, tpu.core_type = #tpu.core_type<tc>, window_params = [{transform_indices = @transform_0, window_bounds = array<i64: 8, 1024>}, {pipeline_mode = #tpu.pipeline_mode<synchronous>, transform_indices = @transform_1, window_bounds = array<i64: 1024, 128>}, {pipeline_mode = #tpu.pipeline_mode<synchronous>, transform_indices = @transform_2, window_bounds = array<i64: 1, 128>}, {transform_indices = @transform_3, window_bounds = array<i64: 8, 128>}]} {
    %c0 = arith.constant 0 : index
    %c0_0 = arith.constant 0 : index
    %0 = vector.load %arg1[%c0, %c0_0] : memref<8x1024xbf16, #tpu.memory_space<vmem>>, vector<8x1024xbf16>
    %c0_1 = arith.constant 0 : index
    %c0_2 = arith.constant 0 : index
    %1 = vector.load %arg2[%c0_1, %c0_2] : memref<1024x128xbf16, #tpu.memory_space<vmem>>, vector<1024x128xbf16>
    %cst = arith.constant dense<0.000000e+00> : vector<8x128xf32>
    %2 = tpu.matmul %0, %1, %cst {dimension_numbers = #tpu.dot_dimension_numbers<[1], [0], [0], [1], [0, 0, 1, 1], [], []>} : vector<8x1024xbf16>, vector<1024x128xbf16>, vector<8x128xf32> -> vector<8x128xf32>
    %c0_3 = arith.constant 0 : index
    %c0_4 = arith.constant 0 : index
    %3 = vector.load %arg3[%c0_3, %c0_4] : memref<1x128xf32, #tpu.memory_space<vmem>>, vector<1x128xf32>
    %4 = vector.broadcast %3 : vector<1x128xf32> to vector<8x128xf32>
    %5 = arith.addf %2, %4 : vector<8x128xf32>
    %6 = tpu.iota {dimensions = array<i32: 1>} : vector<8x128xi32>
    %7 = math.absf %5 : vector<8x128xf32>
    %cst_5 = arith.constant 0.000000e+00 : f32
    %8 = vector.broadcast %cst_5 : f32 to vector<8x128xf32>
    %9 = arith.subf %8, %7 : vector<8x128xf32>
    %10 = math.exp %9 : vector<8x128xf32>
    %cst_6 = arith.constant 0.000000e+00 : f32
    %11 = vector.broadcast %cst_6 : f32 to vector<8x128xf32>
    %12 = arith.cmpf oge, %5, %11 : vector<8x128xf32>
    %cst_7 = arith.constant 1.000000e+00 : f32
    %13 = vector.broadcast %cst_7 : f32 to vector<8x128xf32>
    %14 = arith.addf %13, %10 : vector<8x128xf32>
    %cst_8 = arith.constant 1.000000e+00 : f32
    %15 = vector.broadcast %cst_8 : f32 to vector<8x128xf32>
    %16 = arith.divf %15, %14 : vector<8x128xf32>
    %cst_9 = arith.constant 1.000000e+00 : f32
    %17 = vector.broadcast %cst_9 : f32 to vector<8x128xf32>
    %18 = arith.addf %17, %10 : vector<8x128xf32>
    %19 = arith.divf %10, %18 : vector<8x128xf32>
    %20 = arith.select %12, %16, %19 : vector<8x128xi1>, vector<8x128xf32>
    %c1_i32 = arith.constant 1 : i32
    %21 = vector.broadcast %c1_i32 : i32 to vector<8x128xi32>
    %22 = arith.cmpi sge, %6, %21 : vector<8x128xi32>
    %c4_i32 = arith.constant 4 : i32
    %23 = vector.broadcast %c4_i32 : i32 to vector<8x128xi32>
    %24 = arith.cmpi sle, %6, %23 : vector<8x128xi32>
    %25 = arith.andi %22, %24 : vector<8x128xi1>
    %cst_10 = arith.constant 0xFF800000 : f32
    %26 = vector.broadcast %cst_10 : f32 to vector<8x128xf32>
    %27 = arith.select %25, %5, %26 : vector<8x128xi1>, vector<8x128xf32>
    %cst_11 = arith.constant dense<0xFF800000> : vector<8xf32>
    %28 = vector.multi_reduction <maximumf>, %27, %cst_11 [1] : vector<8x128xf32> to vector<8xf32>
    %29 = vector.shape_cast %28 : vector<8xf32> to vector<8x1xf32>
    %30 = vector.broadcast %29 : vector<8x1xf32> to vector<8x128xf32>
    %31 = arith.subf %27, %30 : vector<8x128xf32>
    %32 = math.exp %31 : vector<8x128xf32>
    %cst_12 = arith.constant dense<0.000000e+00> : vector<8xf32>
    %33 = vector.multi_reduction <add>, %32, %cst_12 [1] : vector<8x128xf32> to vector<8xf32>
    %34 = vector.shape_cast %33 : vector<8xf32> to vector<8x1xf32>
    %35 = math.log %34 : vector<8x1xf32>
    %36 = arith.addf %29, %35 : vector<8x1xf32>
    %c0_i32 = arith.constant 0 : i32
    %37 = vector.broadcast %c0_i32 : i32 to vector<8x128xi32>
    %38 = arith.cmpi eq, %6, %37 : vector<8x128xi32>
    %39 = vector.broadcast %36 : vector<8x1xf32> to vector<8x128xf32>
    %40 = arith.subf %5, %39 : vector<8x128xf32>
    %41 = arith.select %38, %20, %40 : vector<8x128xi1>, vector<8x128xf32>
    %c0_13 = arith.constant 0 : index
    %c0_14 = arith.constant 0 : index
    %42 = vector.load %arg4[%c0_13, %c0_14] : memref<8x128xf32, #tpu.memory_space<vmem>>, vector<8x128xf32>
    tpu.vector_store %arg4[%c0_13, %c0_14], %41 {strides = array<i32>} : memref<8x128xf32, #tpu.memory_space<vmem>>, vector<8x128xf32>,
    return
  }
  func.func @transform_0(%arg0: i32) -> (i32, i32) {
    %c0_i32 = arith.constant 0 : i32
    %c0_i32_0 = arith.constant 0 : i32
    return %arg0, %c0_i32 : i32, i32
  }
  func.func @transform_1(%arg0: i32) -> (i32, i32) {
    %c0_i32 = arith.constant 0 : i32
    %c0_i32_0 = arith.constant 0 : i32
    %c0_i32_1 = arith.constant 0 : i32
    return %c0_i32, %c0_i32_0 : i32, i32
  }
  func.func @transform_2(%arg0: i32) -> (i32, i32) {
    %c0_i32 = arith.constant 0 : i32
    %c0_i32_0 = arith.constant 0 : i32
    %c0_i32_1 = arith.constant 0 : i32
    return %c0_i32, %c0_i32_0 : i32, i32
  }
  func.func @transform_3(%arg0: i32) -> (i32, i32) {
    %c0_i32 = arith.constant 0 : i32
    %c0_i32_0 = arith.constant 0 : i32
    return %arg0, %c0_i32 : i32, i32
  }
}

</mosaic_0001>

<llo_original>
// kernel: _discriminator_forward.4
$region0: #{_discriminator_forward.4}
  #allocation0 [shape = 'u32[]', space=smem, size = 0x4, offset = 0x4, fixed_abs, tag = 'smem constant byte address 0x4 - core index']
  #allocation1 [shape = 'u32[72,128]{1,0:T(1,128)}', space=vmem, size = 0x9000, scoped, tag = 'internal scratch']
  %s0 = inlined_call_operand.vmem [shape: bf16[512,128], index: 0, kind: input, shape index: {}]
  %s1 = inlined_call_operand.vmem [shape: bf16[128,128], index: 1, kind: input, shape index: {}]
  %s2 = inlined_call_operand.vmem [shape: f32[1,128], index: 2, kind: input, shape index: {}]
  %s3 = inlined_call_operand.vmem [shape: f32[512,128], index: 3, kind: output, shape index: {}]
  %s4 = sld [smem:[#allocation0]]
  $region45: #{_discriminator_forward.4} parent=0
    _
  %s6 = ssub.s32 1, %s4
  %s7 = scalar_select 0, %s6, %s4
  loop: start=0, step=1, limit=6
  $region2: #{_discriminator_forward.4} parent=0 // loop_pre_header
    _
  $region3: #{_discriminator_forward.4} parent=0 // loop_header
    %s9 = sphi 0, %s13
    %p10 = scmp.ge.s32.totalorder %s9, 6
    %s19 = sphi 0, %s21
    %s22 = sphi 0, %s19
    %s23 = sphi 0, %s22
    %s39 = sphi 0, %s23
    %s43 = sphi 0, %s43
    %s45 = sphi 0, %s43
    %s46 = sphi 0, %s45
    %s60 = sphi 0, %s46
    %s64 = sphi 0, %s64
    %s66 = sphi 0, %s64
    %s67 = sphi 0, %s66
    %s81 = sphi 0, %s67
    %s87 = sphi 0, %s89
    %s90 = sphi 0, %s87
    %s91 = sphi 0, %s90
    %s107 = sphi 0, %s91
  $region4: #{_discriminator_forward.4} parent=0 // loop_header_branch
    %12 = sbr.rel (%p10) target = $region8
  $region5: #{_discriminator_forward.4} parent=0 // loop_body
    %s14 = ssub.s32 %s9, 1
    %s15 = ssub.s32 %s9, 2
    %s16 = sadd.s32 %s9, 1
    %s17 = ssub.s32 %s9, %s16
    %p18 = scmp.eq.s32.totalorder %s17, 0
    %s20 = sadd.s32 %s19, 1
    %s21 = scalar_select %p18, %s19, %s20
    %p24 = pneg %p18
    %p25 = scmp.eq.s32.totalorder %s9, 3
    %p26 = por %p24, %p25
    %p27 = scmp.ne.s32.totalorder %s19, %s22
    %p28 = scmp.eq.s32.totalorder %s9, 0
    %p29 = por %p27, %p28
    %p30 = scmp.ne.s32.totalorder %s19, %s22
    %p31 = scmp.eq.s32.totalorder %s14, 3
    %p32 = por %p30, %p31
    %p33 = scmp.ne.s32.totalorder %s22, %s23
    %p34 = scmp.eq.s32.totalorder %s14, 0
    %p35 = por %p33, %p34
    %p36 = scmp.ne.s32.totalorder %s22, %s23
    %p37 = scmp.eq.s32.totalorder %s15, 3
    %p38 = por %p36, %p37
    %p40 = scmp.ne.s32.totalorder %s23, %s39
    %p41 = scmp.eq.s32.totalorder %s15, 0
    %p42 = por %p40, %p41
    %s44 = sadd.s32 %s43, 1
    %p47 = scmp.eq.s32.totalorder %s9, 3
    %p48 = scmp.ne.s32.totalorder %s43, %s45
    %p49 = scmp.eq.s32.totalorder %s9, 0
    %p50 = por %p48, %p49
    %p51 = scmp.ne.s32.totalorder %s43, %s45
    %p52 = scmp.eq.s32.totalorder %s14, 3
    %p53 = por %p51, %p52
    %p54 = scmp.ne.s32.totalorder %s45, %s46
    %p55 = scmp.eq.s32.totalorder %s14, 0
    %p56 = por %p54, %p55
    %p57 = scmp.ne.s32.totalorder %s45, %s46
    %p58 = scmp.eq.s32.totalorder %s15, 3
    %p59 = por %p57, %p58
    %p61 = scmp.ne.s32.totalorder %s46, %s60
    %p62 = scmp.eq.s32.totalorder %s15, 0
    %p63 = por %p61, %p62
    %s65 = sadd.s32 %s64, 1
    %p68 = scmp.eq.s32.totalorder %s9, 3
    %p69 = scmp.ne.s32.totalorder %s64, %s66
    %p70 = scmp.eq.s32.totalorder %s9, 0
    %p71 = por %p69, %p70
    %p72 = scmp.ne.s32.totalorder %s64, %s66
    %p73 = scmp.eq.s32.totalorder %s14, 3
    %p74 = por %p72, %p73
    %p75 = scmp.ne.s32.totalorder %s66, %s67
    %p76 = scmp.eq.s32.totalorder %s14, 0
    %p77 = por %p75, %p76
    %p78 = scmp.ne.s32.totalorder %s66, %s67
    %p79 = scmp.eq.s32.totalorder %s15, 3
    %p80 = por %p78, %p79
    %p82 = scmp.ne.s32.totalorder %s67, %s81
    %p83 = scmp.eq.s32.totalorder %s15, 0
    %p84 = por %p82, %p83
    %s85 = ssub.s32 %s9, %s16
    %p86 = scmp.eq.s32.totalorder %s85, 0
    %s88 = sadd.s32 %s87, 1
    %s89 = scalar_select %p86, %s87, %s88
    %p92 = pneg %p86
    %p93 = scmp.eq.s32.totalorder %s9, 3
    %p94 = por %p92, %p93
    %p95 = scmp.ne.s32.totalorder %s87, %s90
    %p96 = scmp.eq.s32.totalorder %s9, 0
    %p97 = por %p95, %p96
    %p98 = scmp.ne.s32.totalorder %s87, %s90
    %p99 = scmp.eq.s32.totalorder %s14, 3
    %p100 = por %p98, %p99
    %p101 = scmp.ne.s32.totalorder %s90, %s91
    %p102 = scmp.eq.s32.totalorder %s14, 0
    %p103 = por %p101, %p102
    %p104 = scmp.ne.s32.totalorder %s90, %s91
    %p105 = scmp.eq.s32.totalorder %s15, 3
    %p106 = por %p104, %p105
    %p108 = scmp.ne.s32.totalorder %s91, %s107
    %p109 = scmp.eq.s32.totalorder %s15, 0
    %p110 = por %p108, %p109
    %p111 = scmp.le.s32.totalorder 1, %s9
    %p112 = scmp.lt.s32.totalorder %s9, 5
    %p113 = pnand %p111, %p112
    %p114 = pneg %p113
    // Predicated region
    $region9: #{_discriminator_forward.4} parent=5 // pred_check
      _
    $region10: #{_discriminator_forward.4} parent=5 // pred_check_branch
      %116 = sbr.rel (%p113) target = $region12
    $region11: #{_discriminator_forward.4} parent=5 // pred_region
      %s117 = ssub.s32 %s9, 1
      // Predicated region
      $region13: #{_discriminator_forward.4} parent=11 // pred_check
        %p118 = pneg %p56
      $region14: #{_discriminator_forward.4} parent=11 // pred_check_branch
        %120 = sbr.rel (%p118) target = $region16
      $region15: #{_discriminator_forward.4} parent=11 // pred_region
        _
      $region16: #{_discriminator_forward.4} parent=11 // pred_fallthru
        _
      // Predicated region
      $region17: #{_discriminator_forward.4} parent=11 // pred_check
        %p121 = pneg %p77
      $region18: #{_discriminator_forward.4} parent=11 // pred_check_branch
        %123 = sbr.rel (%p121) target = $region20
      $region19: #{_discriminator_forward.4} parent=11 // pred_region
        _
      $region20: #{_discriminator_forward.4} parent=11 // pred_fallthru
        _
    $region12: #{_discriminator_forward.4} parent=5 // pred_fallthru
      _
    %p124 = scmp.lt.s32.totalorder %s9, 4
    // Predicated region
    $region21: #{_discriminator_forward.4} parent=5 // pred_check
      %p125 = pneg %p124
    $region22: #{_discriminator_forward.4} parent=5 // pred_check_branch
      %127 = sbr.rel (%p125) target = $region24
    $region23: #{_discriminator_forward.4} parent=5 // pred_region
      // Predicated region
      $region25: #{_discriminator_forward.4} parent=23 // pred_check
        %p128 = pneg %p29
      $region26: #{_discriminator_forward.4} parent=23 // pred_check_branch
        %130 = sbr.rel (%p128) target = $region28
      $region27: #{_discriminator_forward.4} parent=23 // pred_region
        %s131 = smul.u32 16, %s9
        %p132 = scmp.lt.s32.totalorder %s131, 63
        %s133 = scalar_select %p132, %s131, 63
        %s134 = smul.addr %s133, 4
        %s135 = scalar_lea.vmem %s0, %s134
        %s136 = smul.u32 16, %s9
      $region28: #{_discriminator_forward.4} parent=23 // pred_fallthru
        _
    $region24: #{_discriminator_forward.4} parent=5 // pred_fallthru
      _
    %p137 = scmp.le.s32.totalorder 1, %s9
    %p138 = scmp.lt.s32.totalorder %s9, 5
    %p139 = pnand %p137, %p138
    %p140 = pneg %p139
    // Predicated region
    $region29: #{_discriminator_forward.4} parent=5 // pred_check
      _
    $region30: #{_discriminator_forward.4} parent=5 // pred_check_branch
      %142 = sbr.rel (%p139) target = $region32
    $region31: #{_discriminator_forward.4} parent=5 // pred_region
      %s143 = ssub.s32 %s9, 1
      %s144 = smul.u32 16, %s14
      %p145 = scmp.lt.s32.totalorder %s144, 63
      %s146 = scalar_select %p145, %s144, 63
      %s147 = smul.addr %s146, 4
      %s148 = scalar_lea.vmem %s0, %s147
      %p149 = pneg %p35
      %p150 = pneg %p32
      %p151 = pneg %p56
      %p152 = pneg %p53
      %p153 = pneg %p77
      %p154 = pneg %p74
      %p155 = pneg %p103
      %p156 = pneg %p100
      %s157 = smul.u32 16, %s14
      %p158 = scmp.lt.s32.totalorder %s157, 63
      %s159 = scalar_select %p158, %s157, 63
      %s160 = smul.addr %s159, 8
      %s161 = scalar_lea.vmem %s3, %s160
      %s162 = smul.u32 16, %s14
      %p163 = scmp.lt.s32.totalorder %s162, 63
      %s164 = scalar_select %p163, %s162, 63
      %s165 = smul.addr %s164, 4
      %s166 = scalar_lea.vmem %s0, %s165
      %s167 = smul.u32 16, %s14
      %s168 = smul.u32 16, %s14
      %p169 = scmp.lt.s32.totalorder %s168, 63
      %s170 = scalar_select %p169, %s168, 63
      %s171 = smul.addr %s170, 8
      %s172 = scalar_lea.vmem %s3, %s171
      %s173 = smul.u32 16, %s14
      %v174 = vld [vmem:[%s166] sm:$0xf]
      %v175 = vld [vmem:[%s166 + $0x4] sm:$0xf]
      %v176 = vld [vmem:[%s166 + $0x8] sm:$0xf]
      %v177 = vld [vmem:[%s166 + $0xc] sm:$0xf]
      %v178 = vld [vmem:[%s166 + $0x10] sm:$0xf]
      %v179 = vld [vmem:[%s166 + $0x14] sm:$0xf]
      %v180 = vld [vmem:[%s166 + $0x18] sm:$0xf]
      %v181 = vld [vmem:[%s166 + $0x1c] sm:$0xf]
      %v182 = vld [vmem:[%s166 + $0x20] sm:$0xf]
      %v183 = vld [vmem:[%s166 + $0x24] sm:$0xf]
      %v184 = vld [vmem:[%s166 + $0x28] sm:$0xf]
      %v185 = vld [vmem:[%s166 + $0x2c] sm:$0xf]
      %v186 = vld [vmem:[%s166 + $0x30] sm:$0xf]
      %v187 = vld [vmem:[%s166 + $0x34] sm:$0xf]
      %v188 = vld [vmem:[%s166 + $0x38] sm:$0xf]
      %v189 = vld [vmem:[%s166 + $0x3c] sm:$0xf]
      %v190 = vld [vmem:[%s1] sm:$0xf]
      %v191 = vld [vmem:[%s1 + $0x4] sm:$0xf]
      %v192 = vld [vmem:[%s1 + $0x8] sm:$0xf]
      %v193 = vld [vmem:[%s1 + $0xc] sm:$0xf]
      %v194 = vld [vmem:[%s1 + $0x10] sm:$0xf]
      %v195 = vld [vmem:[%s1 + $0x14] sm:$0xf]
      %v196 = vld [vmem:[%s1 + $0x18] sm:$0xf]
      %v197 = vld [vmem:[%s1 + $0x1c] sm:$0xf]
      %v198 = vld [vmem:[%s1 + $0x20] sm:$0xf]
      %v199 = vld [vmem:[%s1 + $0x24] sm:$0xf]
      %v200 = vld [vmem:[%s1 + $0x28] sm:$0xf]
      %v201 = vld [vmem:[%s1 + $0x2c] sm:$0xf]
      %v202 = vld [vmem:[%s1 + $0x30] sm:$0xf]
      %v203 = vld [vmem:[%s1 + $0x34] sm:$0xf]
      %v204 = vld [vmem:[%s1 + $0x38] sm:$0xf]
      %v205 = vld [vmem:[%s1 + $0x3c] sm:$0xf]
      %v206 = vld [vmem:[%s2] sm:$0x1]
      %v208 = vperm.slane %v206, 0
      %v226 = vunpack.c.l.b16 %v174
      %v227 = vunpack.c.l.b16 %v175
      %v228 = vunpack.c.l.b16 %v176
      %v229 = vunpack.c.l.b16 %v177
      %v230 = vunpack.c.l.b16 %v178
      %v231 = vunpack.c.l.b16 %v179
      %v232 = vunpack.c.l.b16 %v180
      %v233 = vunpack.c.l.b16 %v181
      %v234 = vunpack.c.l.b16 %v182
      %v235 = vunpack.c.l.b16 %v183
      %v236 = vunpack.c.l.b16 %v184
      %v237 = vunpack.c.l.b16 %v185
      %v238 = vunpack.c.l.b16 %v186
      %v239 = vunpack.c.l.b16 %v187
      %v240 = vunpack.c.l.b16 %v188
      %v241 = vunpack.c.l.b16 %v189
      %v242 = vpack.c.b16 %v227, %v226
      %v243 = vpack.c.b16 %v229, %v228
      %v244 = vpack.c.b16 %v231, %v230
      %v245 = vpack.c.b16 %v233, %v232
      %v246 = vpack.c.b16 %v235, %v234
      %v247 = vpack.c.b16 %v237, %v236
      %v248 = vpack.c.b16 %v239, %v238
      %v249 = vpack.c.b16 %v241, %v240
      %v274 = vunpack.c.l.b16 %v190
      %v275 = vunpack.c.l.b16 %v191
      %v276 = vunpack.c.l.b16 %v192
      %v277 = vunpack.c.l.b16 %v193
      %v278 = vunpack.c.l.b16 %v194
      %v279 = vunpack.c.l.b16 %v195
      %v280 = vunpack.c.l.b16 %v196
      %v281 = vunpack.c.l.b16 %v197
      %v282 = vunpack.c.l.b16 %v198
      %v283 = vunpack.c.l.b16 %v199
      %v284 = vunpack.c.l.b16 %v200
      %v285 = vunpack.c.l.b16 %v201
      %v286 = vunpack.c.l.b16 %v202
      %v287 = vunpack.c.l.b16 %v203
      %v288 = vunpack.c.l.b16 %v204
      %v289 = vunpack.c.l.b16 %v205
      %v290 = vpack.c.b16 %v275, %v274
      %v291 = vpack.c.b16 %v277, %v276
      %v292 = vpack.c.b16 %v279, %v278
      %v293 = vpack.c.b16 %v281, %v280
      %v294 = vpack.c.b16 %v283, %v282
      %v295 = vpack.c.b16 %v285, %v284
      %v296 = vpack.c.b16 %v287, %v286
      %v297 = vpack.c.b16 %v289, %v288
      %306 = vmatpush.bf16.msra.mxu0 %v297
      %307 = vmatpush.bf16.msra.mxu0 %v296
      %308 = vmatpush.bf16.msra.mxu0 %v295
      %309 = vmatpush.bf16.msra.mxu0 %v294
      %310 = vmatpush.bf16.msra.mxu0 %v293
      %311 = vmatpush.bf16.msra.mxu0 %v292
      %312 = vmatpush.bf16.msra.mxu0 %v291
      %313 = vmatpush.bf16.msra.mxu0 %v290
      %314 = vmatmul.bf16.gmra.mxu0 %v242
      %v315 = vpop.f32.mrf.mxu0
      %v316 = vadd.f32 %v208, %v315
      %v317 = vpop.f32.mrf.mxu0
      %v318 = vadd.f32 %v208, %v317
      %319 = vmatmul.bf16.gmra.mxu0 %v243
      %v320 = vpop.f32.mrf.mxu0
      %v321 = vadd.f32 %v208, %v320
      %v322 = vpop.f32.mrf.mxu0
      %v323 = vadd.f32 %v208, %v322
      %324 = vmatmul.bf16.gmra.mxu0 %v244
      %v325 = vpop.f32.mrf.mxu0
      %v326 = vadd.f32 %v208, %v325
      %v327 = vpop.f32.mrf.mxu0
      %v328 = vadd.f32 %v208, %v327
      %329 = vmatmul.bf16.gmra.mxu0 %v245
      %v330 = vpop.f32.mrf.mxu0
      %v331 = vadd.f32 %v208, %v330
      %v332 = vpop.f32.mrf.mxu0
      %v333 = vadd.f32 %v208, %v332
      %334 = vmatmul.bf16.gmra.mxu0 %v246
      %v335 = vpop.f32.mrf.mxu0
      %v336 = vadd.f32 %v208, %v335
      %v337 = vpop.f32.mrf.mxu0
      %v338 = vadd.f32 %v208, %v337
      %339 = vmatmul.bf16.gmra.mxu0 %v247
      %v340 = vpop.f32.mrf.mxu0
      %v341 = vadd.f32 %v208, %v340
      %v342 = vpop.f32.mrf.mxu0
      %v343 = vadd.f32 %v208, %v342
      %344 = vmatmul.bf16.gmra.mxu0 %v248
      %v345 = vpop.f32.mrf.mxu0
      %v346 = vadd.f32 %v208, %v345
      %v347 = vpop.f32.mrf.mxu0
      %v348 = vadd.f32 %v208, %v347
      %349 = vmatmul.bf16.gmra.mxu0 %v249
      %v350 = vpop.f32.mrf.mxu0
      %v351 = vadd.f32 %v208, %v350
      %v352 = vpop.f32.mrf.mxu0
      %v353 = vadd.f32 %v208, %v352
      %354 = vdwg.mxu0
      %vm355 = vcmp.gt.f32.partialorder %v316, 0.0
      %vm356 = vcmp.gt.f32.partialorder %v318, 0.0
      %vm357 = vcmp.gt.f32.partialorder %v321, 0.0
      %vm358 = vcmp.gt.f32.partialorder %v323, 0.0
      %vm359 = vcmp.gt.f32.partialorder %v326, 0.0
      %vm360 = vcmp.gt.f32.partialorder %v328, 0.0
      %vm361 = vcmp.gt.f32.partialorder %v331, 0.0
      %vm362 = vcmp.gt.f32.partialorder %v333, 0.0
      %vm363 = vcmp.gt.f32.partialorder %v336, 0.0
      %vm364 = vcmp.gt.f32.partialorder %v338, 0.0
      %vm365 = vcmp.gt.f32.partialorder %v341, 0.0
      %vm366 = vcmp.gt.f32.partialorder %v343, 0.0
      %vm367 = vcmp.gt.f32.partialorder %v346, 0.0
      %vm368 = vcmp.gt.f32.partialorder %v348, 0.0
      %vm369 = vcmp.gt.f32.partialorder %v351, 0.0
      %vm370 = vcmp.gt.f32.partialorder %v353, 0.0
      %v371 = vmul.f32 %v316, 0.2
      %v372 = vmul.f32 %v318, 0.2
      %v373 = vmul.f32 %v321, 0.2
      %v374 = vmul.f32 %v323, 0.2
      %v375 = vmul.f32 %v326, 0.2
      %v376 = vmul.f32 %v328, 0.2
      %v377 = vmul.f32 %v331, 0.2
      %v378 = vmul.f32 %v333, 0.2
      %v379 = vmul.f32 %v336, 0.2
      %v380 = vmul.f32 %v338, 0.2
      %v381 = vmul.f32 %v341, 0.2
      %v382 = vmul.f32 %v343, 0.2
      %v383 = vmul.f32 %v346, 0.2
      %v384 = vmul.f32 %v348, 0.2
      %v385 = vmul.f32 %v351, 0.2
      %v386 = vmul.f32 %v353, 0.2
      %v387 = vsel %vm355, %v316, %v371
      %v388 = vsel %vm356, %v318, %v372
      %v389 = vsel %vm357, %v321, %v373
      %v390 = vsel %vm358, %v323, %v374
      %v391 = vsel %vm359, %v326, %v375
      %v392 = vsel %vm360, %v328, %v376
      %v393 = vsel %vm361, %v331, %v377
      %v394 = vsel %vm362, %v333, %v378
      %v395 = vsel %vm363, %v336, %v379
      %v396 = vsel %vm364, %v338, %v380
      %v397 = vsel %vm365, %v341, %v381
      %v398 = vsel %vm366, %v343, %v382
      %v399 = vsel %vm367, %v346, %v383
      %v400 = vsel %vm368, %v348, %v384
      %v401 = vsel %vm369, %v351, %v385
      %v402 = vsel %vm370, %v353, %v386
      %403 = vst [vmem:[%s172] sm:$0xff] %v387
      %404 = vst [vmem:[%s172 + $0x8] sm:$0xff] %v388
      %405 = vst [vmem:[%s172 + $0x10] sm:$0xff] %v389
      %406 = vst [vmem:[%s172 + $0x18] sm:$0xff] %v390
      %407 = vst [vmem:[%s172 + $0x20] sm:$0xff] %v391
      %408 = vst [vmem:[%s172 + $0x28] sm:$0xff] %v392
      %409 = vst [vmem:[%s172 + $0x30] sm:$0xff] %v393
      %410 = vst [vmem:[%s172 + $0x38] sm:$0xff] %v394
      %411 = vst [vmem:[%s172 + $0x40] sm:$0xff] %v395
      %412 = vst [vmem:[%s172 + $0x48] sm:$0xff] %v396
      %413 = vst [vmem:[%s172 + $0x50] sm:$0xff] %v397
      %414 = vst [vmem:[%s172 + $0x58] sm:$0xff] %v398
      %415 = vst [vmem:[%s172 + $0x60] sm:$0xff] %v399
      %416 = vst [vmem:[%s172 + $0x68] sm:$0xff] %v400
      %417 = vst [vmem:[%s172 + $0x70] sm:$0xff] %v401
      %418 = vst [vmem:[%s172 + $0x78] sm:$0xff] %v402
      %s419 = smul.u32 16, %s14
      %p420 = scmp.lt.s32.totalorder %s419, 63
      %s421 = scalar_select %p420, %s419, 63
      %s422 = smul.addr %s421, 8
      %s423 = scalar_lea.vmem %s3, %s422
      // Predicated region
      $region33: #{_discriminator_forward.4} parent=31 // pred_check
        %p424 = pneg %p100
      $region34: #{_discriminator_forward.4} parent=31 // pred_check_branch
        %426 = sbr.rel (%p424) target = $region36
      $region35: #{_discriminator_forward.4} parent=31 // pred_region
        %s427 = smul.u32 16, %s14
      $region36: #{_discriminator_forward.4} parent=31 // pred_fallthru
        _
    $region32: #{_discriminator_forward.4} parent=5 // pred_fallthru
      _
    %p428 = scmp.le.s32.totalorder 2, %s9
    // Predicated region
    $region37: #{_discriminator_forward.4} parent=5 // pred_check
      %p429 = pneg %p428
    $region38: #{_discriminator_forward.4} parent=5 // pred_check_branch
      %431 = sbr.rel (%p429) target = $region40
    $region39: #{_discriminator_forward.4} parent=5 // pred_region
      %s432 = ssub.s32 %s9, 2
      // Predicated region
      $region41: #{_discriminator_forward.4} parent=39 // pred_check
        %p433 = pneg %p106
      $region42: #{_discriminator_forward.4} parent=39 // pred_check_branch
        %435 = sbr.rel (%p433) target = $region44
      $region43: #{_discriminator_forward.4} parent=39 // pred_region
        %s436 = smul.u32 16, %s15
        %p437 = scmp.lt.s32.totalorder %s436, 63
        %s438 = scalar_select %p437, %s436, 63
        %s439 = smul.addr %s438, 8
        %s440 = scalar_lea.vmem %s3, %s439
      $region44: #{_discriminator_forward.4} parent=39 // pred_fallthru
        _
    $region40: #{_discriminator_forward.4} parent=5 // pred_fallthru
      _
  $region6: #{_discriminator_forward.4} parent=0 // loop_footer
    %s13 = sadd.s32 1, %s9
  $region7: #{_discriminator_forward.4} parent=0 // loop_footer_branch
    %8 = sbr.rel target = $region3
  $region8: #{_discriminator_forward.4} parent=0 // loop_exit
    _

// kernel: _discriminator_forward.5
$region0: #{_discriminator_forward.5}
  #allocation0 [shape = 'u32[]', space=smem, size = 0x4, offset = 0x4, fixed_abs, tag = 'smem constant byte address 0x4 - core index']
  #allocation1 [shape = 'u32[72,128]{1,0:T(1,128)}', space=vmem, size = 0x9000, scoped, tag = 'internal scratch']
  %s0 = inlined_call_operand.vmem [shape: bf16[128,512], index: 0, kind: input, shape index: {}]
  %s1 = inlined_call_operand.vmem [shape: bf16[512,128], index: 1, kind: input, shape index: {}]
  %s2 = inlined_call_operand.vmem [shape: f32[1,128], index: 2, kind: input, shape index: {}]
  %s3 = inlined_call_operand.vmem [shape: f32[128,128], index: 3, kind: output, shape index: {}]
  %s4 = sld [smem:[#allocation0]]
  $region45: #{_discriminator_forward.5} parent=0
    _
  %s6 = ssub.s32 1, %s4
  %s7 = scalar_select 0, %s6, %s4
  loop: start=0, step=1, limit=4
  $region2: #{_discriminator_forward.5} parent=0 // loop_pre_header
    _
  $region3: #{_discriminator_forward.5} parent=0 // loop_header
    %s9 = sphi 0, %s13
    %p10 = scmp.ge.s32.totalorder %s9, 4
    %s19 = sphi 0, %s21
    %s22 = sphi 0, %s19
    %s23 = sphi 0, %s22
    %s39 = sphi 0, %s23
    %s43 = sphi 0, %s43
    %s45 = sphi 0, %s43
    %s46 = sphi 0, %s45
    %s60 = sphi 0, %s46
    %s64 = sphi 0, %s64
    %s66 = sphi 0, %s64
    %s67 = sphi 0, %s66
    %s81 = sphi 0, %s67
    %s87 = sphi 0, %s89
    %s90 = sphi 0, %s87
    %s91 = sphi 0, %s90
    %s107 = sphi 0, %s91
  $region4: #{_discriminator_forward.5} parent=0 // loop_header_branch
    %12 = sbr.rel (%p10) target = $region8
  $region5: #{_discriminator_forward.5} parent=0 // loop_body
    %s14 = ssub.s32 %s9, 1
    %s15 = ssub.s32 %s9, 2
    %s16 = sadd.s32 %s9, 1
    %s17 = ssub.s32 %s9, %s16
    %p18 = scmp.eq.s32.totalorder %s17, 0
    %s20 = sadd.s32 %s19, 1
    %s21 = scalar_select %p18, %s19, %s20
    %p24 = pneg %p18
    %p25 = scmp.eq.s32.totalorder %s9, 1
    %p26 = por %p24, %p25
    %p27 = scmp.ne.s32.totalorder %s19, %s22
    %p28 = scmp.eq.s32.totalorder %s9, 0
    %p29 = por %p27, %p28
    %p30 = scmp.ne.s32.totalorder %s19, %s22
    %p31 = scmp.eq.s32.totalorder %s14, 1
    %p32 = por %p30, %p31
    %p33 = scmp.ne.s32.totalorder %s22, %s23
    %p34 = scmp.eq.s32.totalorder %s14, 0
    %p35 = por %p33, %p34
    %p36 = scmp.ne.s32.totalorder %s22, %s23
    %p37 = scmp.eq.s32.totalorder %s15, 1
    %p38 = por %p36, %p37
    %p40 = scmp.ne.s32.totalorder %s23, %s39
    %p41 = scmp.eq.s32.totalorder %s15, 0
    %p42 = por %p40, %p41
    %s44 = sadd.s32 %s43, 1
    %p47 = scmp.eq.s32.totalorder %s9, 1
    %p48 = scmp.ne.s32.totalorder %s43, %s45
    %p49 = scmp.eq.s32.totalorder %s9, 0
    %p50 = por %p48, %p49
    %p51 = scmp.ne.s32.totalorder %s43, %s45
    %p52 = scmp.eq.s32.totalorder %s14, 1
    %p53 = por %p51, %p52
    %p54 = scmp.ne.s32.totalorder %s45, %s46
    %p55 = scmp.eq.s32.totalorder %s14, 0
    %p56 = por %p54, %p55
    %p57 = scmp.ne.s32.totalorder %s45, %s46
    %p58 = scmp.eq.s32.totalorder %s15, 1
    %p59 = por %p57, %p58
    %p61 = scmp.ne.s32.totalorder %s46, %s60
    %p62 = scmp.eq.s32.totalorder %s15, 0
    %p63 = por %p61, %p62
    %s65 = sadd.s32 %s64, 1
    %p68 = scmp.eq.s32.totalorder %s9, 1
    %p69 = scmp.ne.s32.totalorder %s64, %s66
    %p70 = scmp.eq.s32.totalorder %s9, 0
    %p71 = por %p69, %p70
    %p72 = scmp.ne.s32.totalorder %s64, %s66
    %p73 = scmp.eq.s32.totalorder %s14, 1
    %p74 = por %p72, %p73
    %p75 = scmp.ne.s32.totalorder %s66, %s67
    %p76 = scmp.eq.s32.totalorder %s14, 0
    %p77 = por %p75, %p76
    %p78 = scmp.ne.s32.totalorder %s66, %s67
    %p79 = scmp.eq.s32.totalorder %s15, 1
    %p80 = por %p78, %p79
    %p82 = scmp.ne.s32.totalorder %s67, %s81
    %p83 = scmp.eq.s32.totalorder %s15, 0
    %p84 = por %p82, %p83
    %s85 = ssub.s32 %s9, %s16
    %p86 = scmp.eq.s32.totalorder %s85, 0
    %s88 = sadd.s32 %s87, 1
    %s89 = scalar_select %p86, %s87, %s88
    %p92 = pneg %p86
    %p93 = scmp.eq.s32.totalorder %s9, 1
    %p94 = por %p92, %p93
    %p95 = scmp.ne.s32.totalorder %s87, %s90
    %p96 = scmp.eq.s32.totalorder %s9, 0
    %p97 = por %p95, %p96
    %p98 = scmp.ne.s32.totalorder %s87, %s90
    %p99 = scmp.eq.s32.totalorder %s14, 1
    %p100 = por %p98, %p99
    %p101 = scmp.ne.s32.totalorder %s90, %s91
    %p102 = scmp.eq.s32.totalorder %s14, 0
    %p103 = por %p101, %p102
    %p104 = scmp.ne.s32.totalorder %s90, %s91
    %p105 = scmp.eq.s32.totalorder %s15, 1
    %p106 = por %p104, %p105
    %p108 = scmp.ne.s32.totalorder %s91, %s107
    %p109 = scmp.eq.s32.totalorder %s15, 0
    %p110 = por %p108, %p109
    %p111 = scmp.le.s32.totalorder 1, %s9
    %p112 = scmp.lt.s32.totalorder %s9, 3
    %p113 = pnand %p111, %p112
    %p114 = pneg %p113
    // Predicated region
    $region9: #{_discriminator_forward.5} parent=5 // pred_check
      _
    $region10: #{_discriminator_forward.5} parent=5 // pred_check_branch
      %116 = sbr.rel (%p113) target = $region12
    $region11: #{_discriminator_forward.5} parent=5 // pred_region
      %s117 = ssub.s32 %s9, 1
      // Predicated region
      $region13: #{_discriminator_forward.5} parent=11 // pred_check
        %p118 = pneg %p56
      $region14: #{_discriminator_forward.5} parent=11 // pred_check_branch
        %120 = sbr.rel (%p118) target = $region16
      $region15: #{_discriminator_forward.5} parent=11 // pred_region
        _
      $region16: #{_discriminator_forward.5} parent=11 // pred_fallthru
        _
      // Predicated region
      $region17: #{_discriminator_forward.5} parent=11 // pred_check
        %p121 = pneg %p77
      $region18: #{_discriminator_forward.5} parent=11 // pred_check_branch
        %123 = sbr.rel (%p121) target = $region20
      $region19: #{_discriminator_forward.5} parent=11 // pred_region
        _
      $region20: #{_discriminator_forward.5} parent=11 // pred_fallthru
        _
    $region12: #{_discriminator_forward.5} parent=5 // pred_fallthru
      _
    %p124 = scmp.lt.s32.totalorder %s9, 2
    // Predicated region
    $region21: #{_discriminator_forward.5} parent=5 // pred_check
      %p125 = pneg %p124
    $region22: #{_discriminator_forward.5} parent=5 // pred_check_branch
      %127 = sbr.rel (%p125) target = $region24
    $region23: #{_discriminator_forward.5} parent=5 // pred_region
      // Predicated region
      $region25: #{_discriminator_forward.5} parent=23 // pred_check
        %p128 = pneg %p29
      $region26: #{_discriminator_forward.5} parent=23 // pred_check_branch
        %130 = sbr.rel (%p128) target = $region28
      $region27: #{_discriminator_forward.5} parent=23 // pred_region
        %s131 = smul.u32 8, %s9
        %p132 = scmp.lt.s32.totalorder %s131, 15
        %s133 = scalar_select %p132, %s131, 15
        %s134 = smul.addr %s133, 4
        %s135 = smul.addr %s134, 4
        %s136 = scalar_lea.vmem %s0, %s135
        %s137 = smul.u32 8, %s9
      $region28: #{_discriminator_forward.5} parent=23 // pred_fallthru
        _
    $region24: #{_discriminator_forward.5} parent=5 // pred_fallthru
      _
    %p138 = scmp.le.s32.totalorder 1, %s9
    %p139 = scmp.lt.s32.totalorder %s9, 3
    %p140 = pnand %p138, %p139
    %p141 = pneg %p140
    // Predicated region
    $region29: #{_discriminator_forward.5} parent=5 // pred_check
      _
    $region30: #{_discriminator_forward.5} parent=5 // pred_check_branch
      %143 = sbr.rel (%p140) target = $region32
    $region31: #{_discriminator_forward.5} parent=5 // pred_region
      %s144 = ssub.s32 %s9, 1
      %s145 = smul.u32 8, %s14
      %p146 = scmp.lt.s32.totalorder %s145, 15
      %s147 = scalar_select %p146, %s145, 15
      %s148 = smul.addr %s147, 4
      %s149 = smul.addr %s148, 4
      %s150 = scalar_lea.vmem %s0, %s149
      %p151 = pneg %p35
      %p152 = pneg %p32
      %p153 = pneg %p56
      %p154 = pneg %p53
      %p155 = pneg %p77
      %p156 = pneg %p74
      %p157 = pneg %p103
      %p158 = pneg %p100
      %s159 = smul.u32 8, %s14
      %p160 = scmp.lt.s32.totalorder %s159, 15
      %s161 = scalar_select %p160, %s159, 15
      %s162 = smul.addr %s161, 8
      %s163 = scalar_lea.vmem %s3, %s162
      %s164 = smul.u32 8, %s14
      %p165 = scmp.lt.s32.totalorder %s164, 15
      %s166 = scalar_select %p165, %s164, 15
      %s167 = smul.addr %s166, 4
      %s168 = smul.addr %s167, 4
      %s169 = scalar_lea.vmem %s0, %s168
      %s170 = smul.u32 8, %s14
      %s171 = smul.u32 8, %s14
      %p172 = scmp.lt.s32.totalorder %s171, 15
      %s173 = scalar_select %p172, %s171, 15
      %s174 = smul.addr %s173, 8
      %s175 = scalar_lea.vmem %s3, %s174
      %s176 = smul.u32 8, %s14
      %v177 = vld [vmem:[%s169] sm:$0xff]
      %v178 = vld [vmem:[%s169 + $0x8] sm:$0xff]
      %v179 = vld [vmem:[%s169 + $0x10] sm:$0xff]
      %v180 = vld [vmem:[%s169 + $0x18] sm:$0xff]
      %v181 = vld [vmem:[%s169 + $0x20] sm:$0xff]
      %v182 = vld [vmem:[%s169 + $0x28] sm:$0xff]
      %v183 = vld [vmem:[%s169 + $0x30] sm:$0xff]
      %v184 = vld [vmem:[%s169 + $0x38] sm:$0xff]
      %v185 = vld [vmem:[%s169 + $0x40] sm:$0xff]
      %v186 = vld [vmem:[%s169 + $0x48] sm:$0xff]
      %v187 = vld [vmem:[%s169 + $0x50] sm:$0xff]
      %v188 = vld [vmem:[%s169 + $0x58] sm:$0xff]
      %v189 = vld [vmem:[%s169 + $0x60] sm:$0xff]
      %v190 = vld [vmem:[%s169 + $0x68] sm:$0xff]
      %v191 = vld [vmem:[%s169 + $0x70] sm:$0xff]
      %v192 = vld [vmem:[%s169 + $0x78] sm:$0xff]
      %v193 = vld [vmem:[%s1] sm:$0xf]
      %v194 = vld [vmem:[%s1 + $0x4] sm:$0xf]
      %v195 = vld [vmem:[%s1 + $0x8] sm:$0xf]
      %v196 = vld [vmem:[%s1 + $0xc] sm:$0xf]
      %v197 = vld [vmem:[%s1 + $0x10] sm:$0xf]
      %v198 = vld [vmem:[%s1 + $0x14] sm:$0xf]
      %v199 = vld [vmem:[%s1 + $0x18] sm:$0xf]
      %v200 = vld [vmem:[%s1 + $0x1c] sm:$0xf]
      %v201 = vld [vmem:[%s1 + $0x20] sm:$0xf]
      %v202 = vld [vmem:[%s1 + $0x24] sm:$0xf]
      %v203 = vld [vmem:[%s1 + $0x28] sm:$0xf]
      %v204 = vld [vmem:[%s1 + $0x2c] sm:$0xf]
      %v205 = vld [vmem:[%s1 + $0x30] sm:$0xf]
      %v206 = vld [vmem:[%s1 + $0x34] sm:$0xf]
      %v207 = vld [vmem:[%s1 + $0x38] sm:$0xf]
      %v208 = vld [vmem:[%s1 + $0x3c] sm:$0xf]
      %v209 = vld [vmem:[%s1 + $0x40] sm:$0xf]
      %v210 = vld [vmem:[%s1 + $0x44] sm:$0xf]
      %v211 = vld [vmem:[%s1 + $0x48] sm:$0xf]
      %v212 = vld [vmem:[%s1 + $0x4c] sm:$0xf]
      %v213 = vld [vmem:[%s1 + $0x50] sm:$0xf]
      %v214 = vld [vmem:[%s1 + $0x54] sm:$0xf]
      %v215 = vld [vmem:[%s1 + $0x58] sm:$0xf]
      %v216 = vld [vmem:[%s1 + $0x5c] sm:$0xf]
      %v217 = vld [vmem:[%s1 + $0x60] sm:$0xf]
      %v218 = vld [vmem:[%s1 + $0x64] sm:$0xf]
      %v219 = vld [vmem:[%s1 + $0x68] sm:$0xf]
      %v220 = vld [vmem:[%s1 + $0x6c] sm:$0xf]
      %v221 = vld [vmem:[%s1 + $0x70] sm:$0xf]
      %v222 = vld [vmem:[%s1 + $0x74] sm:$0xf]
      %v223 = vld [vmem:[%s1 + $0x78] sm:$0xf]
      %v224 = vld [vmem:[%s1 + $0x7c] sm:$0xf]
      %v225 = vld [vmem:[%s1 + $0x80] sm:$0xf]
      %v226 = vld [vmem:[%s1 + $0x84] sm:$0xf]
      %v227 = vld [vmem:[%s1 + $0x88] sm:$0xf]
      %v228 = vld [vmem:[%s1 + $0x8c] sm:$0xf]
      %v229 = vld [vmem:[%s1 + $0x90] sm:$0xf]
      %v230 = vld [vmem:[%s1 + $0x94] sm:$0xf]
      %v231 = vld [vmem:[%s1 + $0x98] sm:$0xf]
      %v232 = vld [vmem:[%s1 + $0x9c] sm:$0xf]
      %v233 = vld [vmem:[%s1 + $0xa0] sm:$0xf]
      %v234 = vld [vmem:[%s1 + $0xa4] sm:$0xf]
      %v235 = vld [vmem:[%s1 + $0xa8] sm:$0xf]
      %v236 = vld [vmem:[%s1 + $0xac] sm:$0xf]
      %v237 = vld [vmem:[%s1 + $0xb0] sm:$0xf]
      %v238 = vld [vmem:[%s1 + $0xb4] sm:$0xf]
      %v239 = vld [vmem:[%s1 + $0xb8] sm:$0xf]
      %v240 = vld [vmem:[%s1 + $0xbc] sm:$0xf]
      %v241 = vld [vmem:[%s1 + $0xc0] sm:$0xf]
      %v242 = vld [vmem:[%s1 + $0xc4] sm:$0xf]
      %v243 = vld [vmem:[%s1 + $0xc8] sm:$0xf]
      %v244 = vld [vmem:[%s1 + $0xcc] sm:$0xf]
      %v245 = vld [vmem:[%s1 + $0xd0] sm:$0xf]
      %v246 = vld [vmem:[%s1 + $0xd4] sm:$0xf]
      %v247 = vld [vmem:[%s1 + $0xd8] sm:$0xf]
      %v248 = vld [vmem:[%s1 + $0xdc] sm:$0xf]
      %v249 = vld [vmem:[%s1 + $0xe0] sm:$0xf]
      %v250 = vld [vmem:[%s1 + $0xe4] sm:$0xf]
      %v251 = vld [vmem:[%s1 + $0xe8] sm:$0xf]
      %v252 = vld [vmem:[%s1 + $0xec] sm:$0xf]
      %v253 = vld [vmem:[%s1 + $0xf0] sm:$0xf]
      %v254 = vld [vmem:[%s1 + $0xf4] sm:$0xf]
      %v255 = vld [vmem:[%s1 + $0xf8] sm:$0xf]
      %v256 = vld [vmem:[%s1 + $0xfc] sm:$0xf]
      %v257 = vld [vmem:[%s2] sm:$0x1]
      %v259 = vperm.slane %v257, 0
      %v277 = vunpack.c.l.b16 %v177
      %v278 = vunpack.c.h.b16 %v177
      %v279 = vunpack.c.l.b16 %v178
      %v280 = vunpack.c.h.b16 %v178
      %v281 = vunpack.c.l.b16 %v179
      %v282 = vunpack.c.h.b16 %v179
      %v283 = vunpack.c.l.b16 %v180
      %v284 = vunpack.c.h.b16 %v180
      %v285 = vunpack.c.l.b16 %v181
      %v286 = vunpack.c.h.b16 %v181
      %v287 = vunpack.c.l.b16 %v182
      %v288 = vunpack.c.h.b16 %v182
      %v289 = vunpack.c.l.b16 %v183
      %v290 = vunpack.c.h.b16 %v183
      %v291 = vunpack.c.l.b16 %v184
      %v292 = vunpack.c.h.b16 %v184
      %v293 = vunpack.c.l.b16 %v185
      %v294 = vunpack.c.h.b16 %v185
      %v295 = vunpack.c.l.b16 %v186
      %v296 = vunpack.c.h.b16 %v186
      %v297 = vunpack.c.l.b16 %v187
      %v298 = vunpack.c.h.b16 %v187
      %v299 = vunpack.c.l.b16 %v188
      %v300 = vunpack.c.h.b16 %v188
      %v301 = vunpack.c.l.b16 %v189
      %v302 = vunpack.c.h.b16 %v189
      %v303 = vunpack.c.l.b16 %v190
      %v304 = vunpack.c.h.b16 %v190
      %v305 = vunpack.c.l.b16 %v191
      %v306 = vunpack.c.h.b16 %v191
      %v307 = vunpack.c.l.b16 %v192
      %v308 = vunpack.c.h.b16 %v192
      %v309 = vpack.c.b16 %v281, %v277
      %v310 = vpack.c.b16 %v282, %v278
      %v311 = vpack.c.b16 %v283, %v279
      %v312 = vpack.c.b16 %v284, %v280
      %v313 = vpack.c.b16 %v289, %v285
      %v314 = vpack.c.b16 %v290, %v286
      %v315 = vpack.c.b16 %v291, %v287
      %v316 = vpack.c.b16 %v292, %v288
      %v317 = vpack.c.b16 %v297, %v293
      %v318 = vpack.c.b16 %v298, %v294
      %v319 = vpack.c.b16 %v299, %v295
      %v320 = vpack.c.b16 %v300, %v296
      %v321 = vpack.c.b16 %v305, %v301
      %v322 = vpack.c.b16 %v306, %v302
      %v323 = vpack.c.b16 %v307, %v303
      %v324 = vpack.c.b16 %v308, %v304
      %v405 = vunpack.c.l.b16 %v193
      %v406 = vunpack.c.l.b16 %v194
      %v407 = vunpack.c.l.b16 %v195
      %v408 = vunpack.c.l.b16 %v196
      %v409 = vunpack.c.l.b16 %v197
      %v410 = vunpack.c.l.b16 %v198
      %v411 = vunpack.c.l.b16 %v199
      %v412 = vunpack.c.l.b16 %v200
      %v413 = vunpack.c.l.b16 %v201
      %v414 = vunpack.c.l.b16 %v202
      %v415 = vunpack.c.l.b16 %v203
      %v416 = vunpack.c.l.b16 %v204
      %v417 = vunpack.c.l.b16 %v205
      %v418 = vunpack.c.l.b16 %v206
      %v419 = vunpack.c.l.b16 %v207
      %v420 = vunpack.c.l.b16 %v208
      %v421 = vunpack.c.l.b16 %v209
      %v422 = vunpack.c.l.b16 %v210
      %v423 = vunpack.c.l.b16 %v211
      %v424 = vunpack.c.l.b16 %v212
      %v425 = vunpack.c.l.b16 %v213
      %v426 = vunpack.c.l.b16 %v214
      %v427 = vunpack.c.l.b16 %v215
      %v428 = vunpack.c.l.b16 %v216
      %v429 = vunpack.c.l.b16 %v217
      %v430 = vunpack.c.l.b16 %v218
      %v431 = vunpack.c.l.b16 %v219
      %v432 = vunpack.c.l.b16 %v220
      %v433 = vunpack.c.l.b16 %v221
      %v434 = vunpack.c.l.b16 %v222
      %v435 = vunpack.c.l.b16 %v223
      %v436 = vunpack.c.l.b16 %v224
      %v437 = vunpack.c.l.b16 %v225
      %v438 = vunpack.c.l.b16 %v226
      %v439 = vunpack.c.l.b16 %v227
      %v440 = vunpack.c.l.b16 %v228
      %v441 = vunpack.c.l.b16 %v229
      %v442 = vunpack.c.l.b16 %v230
      %v443 = vunpack.c.l.b16 %v231
      %v444 = vunpack.c.l.b16 %v232
      %v445 = vunpack.c.l.b16 %v233
      %v446 = vunpack.c.l.b16 %v234
      %v447 = vunpack.c.l.b16 %v235
      %v448 = vunpack.c.l.b16 %v236
      %v449 = vunpack.c.l.b16 %v237
      %v450 = vunpack.c.l.b16 %v238
      %v451 = vunpack.c.l.b16 %v239
      %v452 = vunpack.c.l.b16 %v240
      %v453 = vunpack.c.l.b16 %v241
      %v454 = vunpack.c.l.b16 %v242
      %v455 = vunpack.c.l.b16 %v243
      %v456 = vunpack.c.l.b16 %v244
      %v457 = vunpack.c.l.b16 %v245
      %v458 = vunpack.c.l.b16 %v246
      %v459 = vunpack.c.l.b16 %v247
      %v460 = vunpack.c.l.b16 %v248
      %v461 = vunpack.c.l.b16 %v249
      %v462 = vunpack.c.l.b16 %v250
      %v463 = vunpack.c.l.b16 %v251
      %v464 = vunpack.c.l.b16 %v252
      %v465 = vunpack.c.l.b16 %v253
      %v466 = vunpack.c.l.b16 %v254
      %v467 = vunpack.c.l.b16 %v255
      %v468 = vunpack.c.l.b16 %v256
      %v469 = vpack.c.b16 %v406, %v405
      %v470 = vpack.c.b16 %v408, %v407
      %v471 = vpack.c.b16 %v410, %v409
      %v472 = vpack.c.b16 %v412, %v411
      %v473 = vpack.c.b16 %v414, %v413
      %v474 = vpack.c.b16 %v416, %v415
      %v475 = vpack.c.b16 %v418, %v417
      %v476 = vpack.c.b16 %v420, %v419
      %v477 = vpack.c.b16 %v422, %v421
      %v478 = vpack.c.b16 %v424, %v423
      %v479 = vpack.c.b16 %v426, %v425
      %v480 = vpack.c.b16 %v428, %v427
      %v481 = vpack.c.b16 %v430, %v429
      %v482 = vpack.c.b16 %v432, %v431
      %v483 = vpack.c.b16 %v434, %v433
      %v484 = vpack.c.b16 %v436, %v435
      %v485 = vpack.c.b16 %v438, %v437
      %v486 = vpack.c.b16 %v440, %v439
      %v487 = vpack.c.b16 %v442, %v441
      %v488 = vpack.c.b16 %v444, %v443
      %v489 = vpack.c.b16 %v446, %v445
      %v490 = vpack.c.b16 %v448, %v447
      %v491 = vpack.c.b16 %v450, %v449
      %v492 = vpack.c.b16 %v452, %v451
      %v493 = vpack.c.b16 %v454, %v453
      %v494 = vpack.c.b16 %v456, %v455
      %v495 = vpack.c.b16 %v458, %v457
      %v496 = vpack.c.b16 %v460, %v459
      %v497 = vpack.c.b16 %v462, %v461
      %v498 = vpack.c.b16 %v464, %v463
      %v499 = vpack.c.b16 %v466, %v465
      %v500 = vpack.c.b16 %v468, %v467
      %533 = vmatpush.bf16.msra.mxu0 %v476
      %534 = vmatpush.bf16.msra.mxu0 %v475
      %535 = vmatpush.bf16.msra.mxu0 %v474
      %536 = vmatpush.bf16.msra.mxu0 %v473
      %537 = vmatpush.bf16.msra.mxu0 %v472
      %538 = vmatpush.bf16.msra.mxu0 %v471
      %539 = vmatpush.bf16.msra.mxu0 %v470
      %540 = vmatpush.bf16.msra.mxu0 %v469
      %541 = vmatmul.bf16.gmra.mxu0 %v309
      %v542 = vpop.f32.mrf.mxu0
      %v543 = vadd.f32 %v259, %v542
      %v544 = vpop.f32.mrf.mxu0
      %v545 = vadd.f32 %v259, %v544
      %546 = vmatmul.bf16.gmra.mxu0 %v313
      %v547 = vpop.f32.mrf.mxu0
      %v548 = vadd.f32 %v259, %v547
      %v549 = vpop.f32.mrf.mxu0
      %v550 = vadd.f32 %v259, %v549
      %551 = vmatmul.bf16.gmra.mxu0 %v317
      %v552 = vpop.f32.mrf.mxu0
      %v553 = vadd.f32 %v259, %v552
      %v554 = vpop.f32.mrf.mxu0
      %v555 = vadd.f32 %v259, %v554
      %556 = vmatmul.bf16.gmra.mxu0 %v321
      %v557 = vpop.f32.mrf.mxu0
      %v558 = vadd.f32 %v259, %v557
      %v559 = vpop.f32.mrf.mxu0
      %v560 = vadd.f32 %v259, %v559
      %561 = vdwg.mxu0
      %562 = vmatpush.bf16.msra.mxu0 %v484
      %563 = vmatpush.bf16.msra.mxu0 %v483
      %564 = vmatpush.bf16.msra.mxu0 %v482
      %565 = vmatpush.bf16.msra.mxu0 %v481
      %566 = vmatpush.bf16.msra.mxu0 %v480
      %567 = vmatpush.bf16.msra.mxu0 %v479
      %568 = vmatpush.bf16.msra.mxu0 %v478
      %569 = vmatpush.bf16.msra.mxu0 %v477
      %570 = vmatmul.bf16.gmra.mxu0 %v310
      %v571 = vpop.f32.mrf.mxu0
      %v572 = vadd.f32 %v543, %v571
      %v573 = vpop.f32.mrf.mxu0
      %v574 = vadd.f32 %v545, %v573
      %575 = vmatmul.bf16.gmra.mxu0 %v314
      %v576 = vpop.f32.mrf.mxu0
      %v577 = vadd.f32 %v548, %v576
      %v578 = vpop.f32.mrf.mxu0
      %v579 = vadd.f32 %v550, %v578
      %580 = vmatmul.bf16.gmra.mxu0 %v318
      %v581 = vpop.f32.mrf.mxu0
      %v582 = vadd.f32 %v553, %v581
      %v583 = vpop.f32.mrf.mxu0
      %v584 = vadd.f32 %v555, %v583
      %585 = vmatmul.bf16.gmra.mxu0 %v322
      %v586 = vpop.f32.mrf.mxu0
      %v587 = vadd.f32 %v558, %v586
      %v588 = vpop.f32.mrf.mxu0
      %v589 = vadd.f32 %v560, %v588
      %590 = vdwg.mxu0
      %591 = vmatpush.bf16.msra.mxu0 %v492
      %592 = vmatpush.bf16.msra.mxu0 %v491
      %593 = vmatpush.bf16.msra.mxu0 %v490
      %594 = vmatpush.bf16.msra.mxu0 %v489
      %595 = vmatpush.bf16.msra.mxu0 %v488
      %596 = vmatpush.bf16.msra.mxu0 %v487
      %597 = vmatpush.bf16.msra.mxu0 %v486
      %598 = vmatpush.bf16.msra.mxu0 %v485
      %599 = vmatmul.bf16.gmra.mxu0 %v311
      %v600 = vpop.f32.mrf.mxu0
      %v601 = vadd.f32 %v572, %v600
      %v602 = vpop.f32.mrf.mxu0
      %v603 = vadd.f32 %v574, %v602
      %604 = vmatmul.bf16.gmra.mxu0 %v315
      %v605 = vpop.f32.mrf.mxu0
      %v606 = vadd.f32 %v577, %v605
      %v607 = vpop.f32.mrf.mxu0
      %v608 = vadd.f32 %v579, %v607
      %609 = vmatmul.bf16.gmra.mxu0 %v319
      %v610 = vpop.f32.mrf.mxu0
      %v611 = vadd.f32 %v582, %v610
      %v612 = vpop.f32.mrf.mxu0
      %v613 = vadd.f32 %v584, %v612
      %614 = vmatmul.bf16.gmra.mxu0 %v323
      %v615 = vpop.f32.mrf.mxu0
      %v616 = vadd.f32 %v587, %v615
      %v617 = vpop.f32.mrf.mxu0
      %v618 = vadd.f32 %v589, %v617
      %619 = vdwg.mxu0
      %620 = vmatpush.bf16.msra.mxu0 %v500
      %621 = vmatpush.bf16.msra.mxu0 %v499
      %622 = vmatpush.bf16.msra.mxu0 %v498
      %623 = vmatpush.bf16.msra.mxu0 %v497
      %624 = vmatpush.bf16.msra.mxu0 %v496
      %625 = vmatpush.bf16.msra.mxu0 %v495
      %626 = vmatpush.bf16.msra.mxu0 %v494
      %627 = vmatpush.bf16.msra.mxu0 %v493
      %628 = vmatmul.bf16.gmra.mxu0 %v312
      %v629 = vpop.f32.mrf.mxu0
      %v630 = vadd.f32 %v601, %v629
      %v631 = vpop.f32.mrf.mxu0
      %v632 = vadd.f32 %v603, %v631
      %633 = vmatmul.bf16.gmra.mxu0 %v316
      %v634 = vpop.f32.mrf.mxu0
      %v635 = vadd.f32 %v606, %v634
      %v636 = vpop.f32.mrf.mxu0
      %v637 = vadd.f32 %v608, %v636
      %638 = vmatmul.bf16.gmra.mxu0 %v320
      %v639 = vpop.f32.mrf.mxu0
      %v640 = vadd.f32 %v611, %v639
      %v641 = vpop.f32.mrf.mxu0
      %v642 = vadd.f32 %v613, %v641
      %643 = vmatmul.bf16.gmra.mxu0 %v324
      %v644 = vpop.f32.mrf.mxu0
      %v645 = vadd.f32 %v616, %v644
      %v646 = vpop.f32.mrf.mxu0
      %v647 = vadd.f32 %v618, %v646
      %648 = vdwg.mxu0
      %vm649 = vcmp.gt.f32.partialorder %v630, 0.0
      %vm650 = vcmp.gt.f32.partialorder %v632, 0.0
      %vm651 = vcmp.gt.f32.partialorder %v635, 0.0
      %vm652 = vcmp.gt.f32.partialorder %v637, 0.0
      %vm653 = vcmp.gt.f32.partialorder %v640, 0.0
      %vm654 = vcmp.gt.f32.partialorder %v642, 0.0
      %vm655 = vcmp.gt.f32.partialorder %v645, 0.0
      %vm656 = vcmp.gt.f32.partialorder %v647, 0.0
      %v657 = vmul.f32 %v630, 0.2
      %v658 = vmul.f32 %v632, 0.2
      %v659 = vmul.f32 %v635, 0.2
      %v660 = vmul.f32 %v637, 0.2
      %v661 = vmul.f32 %v640, 0.2
      %v662 = vmul.f32 %v642, 0.2
      %v663 = vmul.f32 %v645, 0.2
      %v664 = vmul.f32 %v647, 0.2
      %v665 = vsel %vm649, %v630, %v657
      %v666 = vsel %vm650, %v632, %v658
      %v667 = vsel %vm651, %v635, %v659
      %v668 = vsel %vm652, %v637, %v660
      %v669 = vsel %vm653, %v640, %v661
      %v670 = vsel %vm654, %v642, %v662
      %v671 = vsel %vm655, %v645, %v663
      %v672 = vsel %vm656, %v647, %v664
      %673 = vst [vmem:[%s175] sm:$0xff] %v665
      %674 = vst [vmem:[%s175 + $0x8] sm:$0xff] %v666
      %675 = vst [vmem:[%s175 + $0x10] sm:$0xff] %v667
      %676 = vst [vmem:[%s175 + $0x18] sm:$0xff] %v668
      %677 = vst [vmem:[%s175 + $0x20] sm:$0xff] %v669
      %678 = vst [vmem:[%s175 + $0x28] sm:$0xff] %v670
      %679 = vst [vmem:[%s175 + $0x30] sm:$0xff] %v671
      %680 = vst [vmem:[%s175 + $0x38] sm:$0xff] %v672
      %s681 = smul.u32 8, %s14
      %p682 = scmp.lt.s32.totalorder %s681, 15
      %s683 = scalar_select %p682, %s681, 15
      %s684 = smul.addr %s683, 8
      %s685 = scalar_lea.vmem %s3, %s684
      // Predicated region
      $region33: #{_discriminator_forward.5} parent=31 // pred_check
        %p686 = pneg %p100
      $region34: #{_discriminator_forward.5} parent=31 // pred_check_branch
        %688 = sbr.rel (%p686) target = $region36
      $region35: #{_discriminator_forward.5} parent=31 // pred_region
        %s689 = smul.u32 8, %s14
      $region36: #{_discriminator_forward.5} parent=31 // pred_fallthru
        _
    $region32: #{_discriminator_forward.5} parent=5 // pred_fallthru
      _
    %p690 = scmp.le.s32.totalorder 2, %s9
    // Predicated region
    $region37: #{_discriminator_forward.5} parent=5 // pred_check
      %p691 = pneg %p690
    $region38: #{_discriminator_forward.5} parent=5 // pred_check_branch
      %693 = sbr.rel (%p691) target = $region40
    $region39: #{_discriminator_forward.5} parent=5 // pred_region
      %s694 = ssub.s32 %s9, 2
      // Predicated region
      $region41: #{_discriminator_forward.5} parent=39 // pred_check
        %p695 = pneg %p106
      $region42: #{_discriminator_forward.5} parent=39 // pred_check_branch
        %697 = sbr.rel (%p695) target = $region44
      $region43: #{_discriminator_forward.5} parent=39 // pred_region
        %s698 = smul.u32 8, %s15
        %p699 = scmp.lt.s32.totalorder %s698, 15
        %s700 = scalar_select %p699, %s698, 15
        %s701 = smul.addr %s700, 8
        %s702 = scalar_lea.vmem %s3, %s701
      $region44: #{_discriminator_forward.5} parent=39 // pred_fallthru
        _
    $region40: #{_discriminator_forward.5} parent=5 // pred_fallthru
      _
  $region6: #{_discriminator_forward.5} parent=0 // loop_footer
    %s13 = sadd.s32 1, %s9
  $region7: #{_discriminator_forward.5} parent=0 // loop_footer_branch
    %8 = sbr.rel target = $region3
  $region8: #{_discriminator_forward.5} parent=0 // loop_exit
    _

// kernel: _discriminator_forward.6
$region0: #{_discriminator_forward.6}
  #allocation0 [shape = 'u32[]', space=smem, size = 0x4, offset = 0x4, fixed_abs, tag = 'smem constant byte address 0x4 - core index']
  #allocation1 [shape = 'u32[72,128]{1,0:T(1,128)}', space=vmem, size = 0x9000, scoped, tag = 'internal scratch']
  %s0 = inlined_call_operand.vmem [shape: bf16[32,896], index: 0, kind: input, shape index: {}]
  %s1 = inlined_call_operand.vmem [shape: bf16[896,128], index: 1, kind: input, shape index: {}]
  %s2 = inlined_call_operand.vmem [shape: f32[1,128], index: 2, kind: input, shape index: {}]
  %s3 = inlined_call_operand.vmem [shape: f32[32,128], index: 3, kind: output, shape index: {}]
  %s4 = sld [smem:[#allocation0]]
  $region45: #{_discriminator_forward.6} parent=0
    _
  %s6 = ssub.s32 1, %s4
  %s7 = scalar_select 0, %s6, %s4
  loop: start=0, step=1, limit=4
  $region2: #{_discriminator_forward.6} parent=0 // loop_pre_header
    _
  $region3: #{_discriminator_forward.6} parent=0 // loop_header
    %s9 = sphi 0, %s13
    %p10 = scmp.ge.s32.totalorder %s9, 4
    %s19 = sphi 0, %s21
    %s22 = sphi 0, %s19
    %s23 = sphi 0, %s22
    %s39 = sphi 0, %s23
    %s43 = sphi 0, %s43
    %s45 = sphi 0, %s43
    %s46 = sphi 0, %s45
    %s60 = sphi 0, %s46
    %s64 = sphi 0, %s64
    %s66 = sphi 0, %s64
    %s67 = sphi 0, %s66
    %s81 = sphi 0, %s67
    %s87 = sphi 0, %s89
    %s90 = sphi 0, %s87
    %s91 = sphi 0, %s90
    %s107 = sphi 0, %s91
  $region4: #{_discriminator_forward.6} parent=0 // loop_header_branch
    %12 = sbr.rel (%p10) target = $region8
  $region5: #{_discriminator_forward.6} parent=0 // loop_body
    %s14 = ssub.s32 %s9, 1
    %s15 = ssub.s32 %s9, 2
    %s16 = sadd.s32 %s9, 1
    %s17 = ssub.s32 %s9, %s16
    %p18 = scmp.eq.s32.totalorder %s17, 0
    %s20 = sadd.s32 %s19, 1
    %s21 = scalar_select %p18, %s19, %s20
    %p24 = pneg %p18
    %p25 = scmp.eq.s32.totalorder %s9, 1
    %p26 = por %p24, %p25
    %p27 = scmp.ne.s32.totalorder %s19, %s22
    %p28 = scmp.eq.s32.totalorder %s9, 0
    %p29 = por %p27, %p28
    %p30 = scmp.ne.s32.totalorder %s19, %s22
    %p31 = scmp.eq.s32.totalorder %s14, 1
    %p32 = por %p30, %p31
    %p33 = scmp.ne.s32.totalorder %s22, %s23
    %p34 = scmp.eq.s32.totalorder %s14, 0
    %p35 = por %p33, %p34
    %p36 = scmp.ne.s32.totalorder %s22, %s23
    %p37 = scmp.eq.s32.totalorder %s15, 1
    %p38 = por %p36, %p37
    %p40 = scmp.ne.s32.totalorder %s23, %s39
    %p41 = scmp.eq.s32.totalorder %s15, 0
    %p42 = por %p40, %p41
    %s44 = sadd.s32 %s43, 1
    %p47 = scmp.eq.s32.totalorder %s9, 1
    %p48 = scmp.ne.s32.totalorder %s43, %s45
    %p49 = scmp.eq.s32.totalorder %s9, 0
    %p50 = por %p48, %p49
    %p51 = scmp.ne.s32.totalorder %s43, %s45
    %p52 = scmp.eq.s32.totalorder %s14, 1
    %p53 = por %p51, %p52
    %p54 = scmp.ne.s32.totalorder %s45, %s46
    %p55 = scmp.eq.s32.totalorder %s14, 0
    %p56 = por %p54, %p55
    %p57 = scmp.ne.s32.totalorder %s45, %s46
    %p58 = scmp.eq.s32.totalorder %s15, 1
    %p59 = por %p57, %p58
    %p61 = scmp.ne.s32.totalorder %s46, %s60
    %p62 = scmp.eq.s32.totalorder %s15, 0
    %p63 = por %p61, %p62
    %s65 = sadd.s32 %s64, 1
    %p68 = scmp.eq.s32.totalorder %s9, 1
    %p69 = scmp.ne.s32.totalorder %s64, %s66
    %p70 = scmp.eq.s32.totalorder %s9, 0
    %p71 = por %p69, %p70
    %p72 = scmp.ne.s32.totalorder %s64, %s66
    %p73 = scmp.eq.s32.totalorder %s14, 1
    %p74 = por %p72, %p73
    %p75 = scmp.ne.s32.totalorder %s66, %s67
    %p76 = scmp.eq.s32.totalorder %s14, 0
    %p77 = por %p75, %p76
    %p78 = scmp.ne.s32.totalorder %s66, %s67
    %p79 = scmp.eq.s32.totalorder %s15, 1
    %p80 = por %p78, %p79
    %p82 = scmp.ne.s32.totalorder %s67, %s81
    %p83 = scmp.eq.s32.totalorder %s15, 0
    %p84 = por %p82, %p83
    %s85 = ssub.s32 %s9, %s16
    %p86 = scmp.eq.s32.totalorder %s85, 0
    %s88 = sadd.s32 %s87, 1
    %s89 = scalar_select %p86, %s87, %s88
    %p92 = pneg %p86
    %p93 = scmp.eq.s32.totalorder %s9, 1
    %p94 = por %p92, %p93
    %p95 = scmp.ne.s32.totalorder %s87, %s90
    %p96 = scmp.eq.s32.totalorder %s9, 0
    %p97 = por %p95, %p96
    %p98 = scmp.ne.s32.totalorder %s87, %s90
    %p99 = scmp.eq.s32.totalorder %s14, 1
    %p100 = por %p98, %p99
    %p101 = scmp.ne.s32.totalorder %s90, %s91
    %p102 = scmp.eq.s32.totalorder %s14, 0
    %p103 = por %p101, %p102
    %p104 = scmp.ne.s32.totalorder %s90, %s91
    %p105 = scmp.eq.s32.totalorder %s15, 1
    %p106 = por %p104, %p105
    %p108 = scmp.ne.s32.totalorder %s91, %s107
    %p109 = scmp.eq.s32.totalorder %s15, 0
    %p110 = por %p108, %p109
    %p111 = scmp.le.s32.totalorder 1, %s9
    %p112 = scmp.lt.s32.totalorder %s9, 3
    %p113 = pnand %p111, %p112
    %p114 = pneg %p113
    // Predicated region
    $region9: #{_discriminator_forward.6} parent=5 // pred_check
      _
    $region10: #{_discriminator_forward.6} parent=5 // pred_check_branch
      %116 = sbr.rel (%p113) target = $region12
    $region11: #{_discriminator_forward.6} parent=5 // pred_region
      %s117 = ssub.s32 %s9, 1
      // Predicated region
      $region13: #{_discriminator_forward.6} parent=11 // pred_check
        %p118 = pneg %p56
      $region14: #{_discriminator_forward.6} parent=11 // pred_check_branch
        %120 = sbr.rel (%p118) target = $region16
      $region15: #{_discriminator_forward.6} parent=11 // pred_region
        _
      $region16: #{_discriminator_forward.6} parent=11 // pred_fallthru
        _
      // Predicated region
      $region17: #{_discriminator_forward.6} parent=11 // pred_check
        %p121 = pneg %p77
      $region18: #{_discriminator_forward.6} parent=11 // pred_check_branch
        %123 = sbr.rel (%p121) target = $region20
      $region19: #{_discriminator_forward.6} parent=11 // pred_region
        _
      $region20: #{_discriminator_forward.6} parent=11 // pred_fallthru
        _
    $region12: #{_discriminator_forward.6} parent=5 // pred_fallthru
      _
    %p124 = scmp.lt.s32.totalorder %s9, 2
    // Predicated region
    $region21: #{_discriminator_forward.6} parent=5 // pred_check
      %p125 = pneg %p124
    $region22: #{_discriminator_forward.6} parent=5 // pred_check_branch
      %127 = sbr.rel (%p125) target = $region24
    $region23: #{_discriminator_forward.6} parent=5 // pred_region
      // Predicated region
      $region25: #{_discriminator_forward.6} parent=23 // pred_check
        %p128 = pneg %p29
      $region26: #{_discriminator_forward.6} parent=23 // pred_check_branch
        %130 = sbr.rel (%p128) target = $region28
      $region27: #{_discriminator_forward.6} parent=23 // pred_region
        %s131 = smul.u32 2, %s9
        %p132 = scmp.lt.s32.totalorder %s131, 3
        %s133 = scalar_select %p132, %s131, 3
        %s134 = smul.addr %s133, 7
        %s135 = smul.addr %s134, 4
        %s136 = scalar_lea.vmem %s0, %s135
        %s137 = smul.u32 2, %s9
      $region28: #{_discriminator_forward.6} parent=23 // pred_fallthru
        _
    $region24: #{_discriminator_forward.6} parent=5 // pred_fallthru
      _
    %p138 = scmp.le.s32.totalorder 1, %s9
    %p139 = scmp.lt.s32.totalorder %s9, 3
    %p140 = pnand %p138, %p139
    %p141 = pneg %p140
    // Predicated region
    $region29: #{_discriminator_forward.6} parent=5 // pred_check
      _
    $region30: #{_discriminator_forward.6} parent=5 // pred_check_branch
      %143 = sbr.rel (%p140) target = $region32
    $region31: #{_discriminator_forward.6} parent=5 // pred_region
      %s144 = ssub.s32 %s9, 1
      %s145 = smul.u32 2, %s14
      %p146 = scmp.lt.s32.totalorder %s145, 3
      %s147 = scalar_select %p146, %s145, 3
      %s148 = smul.addr %s147, 7
      %s149 = smul.addr %s148, 4
      %s150 = scalar_lea.vmem %s0, %s149
      %p151 = pneg %p35
      %p152 = pneg %p32
      %p153 = pneg %p56
      %p154 = pneg %p53
      %p155 = pneg %p77
      %p156 = pneg %p74
      %p157 = pneg %p103
      %p158 = pneg %p100
      %s159 = smul.u32 2, %s14
      %p160 = scmp.lt.s32.totalorder %s159, 3
      %s161 = scalar_select %p160, %s159, 3
      %s162 = smul.addr %s161, 8
      %s163 = scalar_lea.vmem %s3, %s162
      %s164 = smul.u32 2, %s14
      %p165 = scmp.lt.s32.totalorder %s164, 3
      %s166 = scalar_select %p165, %s164, 3
      %s167 = smul.addr %s166, 7
      %s168 = smul.addr %s167, 4
      %s169 = scalar_lea.vmem %s0, %s168
      %s170 = smul.u32 2, %s14
      %s171 = smul.u32 2, %s14
      %p172 = scmp.lt.s32.totalorder %s171, 3
      %s173 = scalar_select %p172, %s171, 3
      %s174 = smul.addr %s173, 8
      %s175 = scalar_lea.vmem %s3, %s174
      %s176 = smul.u32 2, %s14
      %v177 = vld [vmem:[%s169] sm:$0xff]
      %v178 = vld [vmem:[%s169 + $0x8] sm:$0xff]
      %v179 = vld [vmem:[%s169 + $0x10] sm:$0xff]
      %v180 = vld [vmem:[%s169 + $0x18] sm:$0xf]
      %v181 = vld [vmem:[%s169 + $0x1c] sm:$0xff]
      %v182 = vld [vmem:[%s169 + $0x24] sm:$0xff]
      %v183 = vld [vmem:[%s169 + $0x2c] sm:$0xff]
      %v184 = vld [vmem:[%s169 + $0x34] sm:$0xf]
      %v185 = vld [vmem:[%s1] sm:$0xf]
      %v186 = vld [vmem:[%s1 + $0x4] sm:$0xf]
      %v187 = vld [vmem:[%s1 + $0x8] sm:$0xf]
      %v188 = vld [vmem:[%s1 + $0xc] sm:$0xf]
      %v189 = vld [vmem:[%s1 + $0x10] sm:$0xf]
      %v190 = vld [vmem:[%s1 + $0x14] sm:$0xf]
      %v191 = vld [vmem:[%s1 + $0x18] sm:$0xf]
      %v192 = vld [vmem:[%s1 + $0x1c] sm:$0xf]
      %v193 = vld [vmem:[%s1 + $0x20] sm:$0xf]
      %v194 = vld [vmem:[%s1 + $0x24] sm:$0xf]
      %v195 = vld [vmem:[%s1 + $0x28] sm:$0xf]
      %v196 = vld [vmem:[%s1 + $0x2c] sm:$0xf]
      %v197 = vld [vmem:[%s1 + $0x30] sm:$0xf]
      %v198 = vld [vmem:[%s1 + $0x34] sm:$0xf]
      %v199 = vld [vmem:[%s1 + $0x38] sm:$0xf]
      %v200 = vld [vmem:[%s1 + $0x3c] sm:$0xf]
      %v201 = vld [vmem:[%s1 + $0x40] sm:$0xf]
      %v202 = vld [vmem:[%s1 + $0x44] sm:$0xf]
      %v203 = vld [vmem:[%s1 + $0x48] sm:$0xf]
      %v204 = vld [vmem:[%s1 + $0x4c] sm:$0xf]
      %v205 = vld [vmem:[%s1 + $0x50] sm:$0xf]
      %v206 = vld [vmem:[%s1 + $0x54] sm:$0xf]
      %v207 = vld [vmem:[%s1 + $0x58] sm:$0xf]
      %v208 = vld [vmem:[%s1 + $0x5c] sm:$0xf]
      %v209 = vld [vmem:[%s1 + $0x60] sm:$0xf]
      %v210 = vld [vmem:[%s1 + $0x64] sm:$0xf]
      %v211 = vld [vmem:[%s1 + $0x68] sm:$0xf]
      %v212 = vld [vmem:[%s1 + $0x6c] sm:$0xf]
      %v213 = vld [vmem:[%s1 + $0x70] sm:$0xf]
      %v214 = vld [vmem:[%s1 + $0x74] sm:$0xf]
      %v215 = vld [vmem:[%s1 + $0x78] sm:$0xf]
      %v216 = vld [vmem:[%s1 + $0x7c] sm:$0xf]
      %v217 = vld [vmem:[%s1 + $0x80] sm:$0xf]
      %v218 = vld [vmem:[%s1 + $0x84] sm:$0xf]
      %v219 = vld [vmem:[%s1 + $0x88] sm:$0xf]
      %v220 = vld [vmem:[%s1 + $0x8c] sm:$0xf]
      %v221 = vld [vmem:[%s1 + $0x90] sm:$0xf]
      %v222 = vld [vmem:[%s1 + $0x94] sm:$0xf]
      %v223 = vld [vmem:[%s1 + $0x98] sm:$0xf]
      %v224 = vld [vmem:[%s1 + $0x9c] sm:$0xf]
      %v225 = vld [vmem:[%s1 + $0xa0] sm:$0xf]
      %v226 = vld [vmem:[%s1 + $0xa4] sm:$0xf]
      %v227 = vld [vmem:[%s1 + $0xa8] sm:$0xf]
      %v228 = vld [vmem:[%s1 + $0xac] sm:$0xf]
      %v229 = vld [vmem:[%s1 + $0xb0] sm:$0xf]
      %v230 = vld [vmem:[%s1 + $0xb4] sm:$0xf]
      %v231 = vld [vmem:[%s1 + $0xb8] sm:$0xf]
      %v232 = vld [vmem:[%s1 + $0xbc] sm:$0xf]
      %v233 = vld [vmem:[%s1 + $0xc0] sm:$0xf]
      %v234 = vld [vmem:[%s1 + $0xc4] sm:$0xf]
      %v235 = vld [vmem:[%s1 + $0xc8] sm:$0xf]
      %v236 = vld [vmem:[%s1 + $0xcc] sm:$0xf]
      %v237 = vld [vmem:[%s1 + $0xd0] sm:$0xf]
      %v238 = vld [vmem:[%s1 + $0xd4] sm:$0xf]
      %v239 = vld [vmem:[%s1 + $0xd8] sm:$0xf]
      %v240 = vld [vmem:[%s1 + $0xdc] sm:$0xf]
      %v241 = vld [vmem:[%s1 + $0xe0] sm:$0xf]
      %v242 = vld [vmem:[%s1 + $0xe4] sm:$0xf]
      %v243 = vld [vmem:[%s1 + $0xe8] sm:$0xf]
      %v244 = vld [vmem:[%s1 + $0xec] sm:$0xf]
      %v245 = vld [vmem:[%s1 + $0xf0] sm:$0xf]
      %v246 = vld [vmem:[%s1 + $0xf4] sm:$0xf]
      %v247 = vld [vmem:[%s1 + $0xf8] sm:$0xf]
      %v248 = vld [vmem:[%s1 + $0xfc] sm:$0xf]
      %v249 = vld [vmem:[%s1 + $0x100] sm:$0xf]
      %v250 = vld [vmem:[%s1 + $0x104] sm:$0xf]
      %v251 = vld [vmem:[%s1 + $0x108] sm:$0xf]
      %v252 = vld [vmem:[%s1 + $0x10c] sm:$0xf]
      %v253 = vld [vmem:[%s1 + $0x110] sm:$0xf]
      %v254 = vld [vmem:[%s1 + $0x114] sm:$0xf]
      %v255 = vld [vmem:[%s1 + $0x118] sm:$0xf]
      %v256 = vld [vmem:[%s1 + $0x11c] sm:$0xf]
      %v257 = vld [vmem:[%s1 + $0x120] sm:$0xf]
      %v258 = vld [vmem:[%s1 + $0x124] sm:$0xf]
      %v259 = vld [vmem:[%s1 + $0x128] sm:$0xf]
      %v260 = vld [vmem:[%s1 + $0x12c] sm:$0xf]
      %v261 = vld [vmem:[%s1 + $0x130] sm:$0xf]
      %v262 = vld [vmem:[%s1 + $0x134] sm:$0xf]
      %v263 = vld [vmem:[%s1 + $0x138] sm:$0xf]
      %v264 = vld [vmem:[%s1 + $0x13c] sm:$0xf]
      %v265 = vld [vmem:[%s1 + $0x140] sm:$0xf]
      %v266 = vld [vmem:[%s1 + $0x144] sm:$0xf]
      %v267 = vld [vmem:[%s1 + $0x148] sm:$0xf]
      %v268 = vld [vmem:[%s1 + $0x14c] sm:$0xf]
      %v269 = vld [vmem:[%s1 + $0x150] sm:$0xf]
      %v270 = vld [vmem:[%s1 + $0x154] sm:$0xf]
      %v271 = vld [vmem:[%s1 + $0x158] sm:$0xf]
      %v272 = vld [vmem:[%s1 + $0x15c] sm:$0xf]
      %v273 = vld [vmem:[%s1 + $0x160] sm:$0xf]
      %v274 = vld [vmem:[%s1 + $0x164] sm:$0xf]
      %v275 = vld [vmem:[%s1 + $0x168] sm:$0xf]
      %v276 = vld [vmem:[%s1 + $0x16c] sm:$0xf]
      %v277 = vld [vmem:[%s1 + $0x170] sm:$0xf]
      %v278 = vld [vmem:[%s1 + $0x174] sm:$0xf]
      %v279 = vld [vmem:[%s1 + $0x178] sm:$0xf]
      %v280 = vld [vmem:[%s1 + $0x17c] sm:$0xf]
      %v281 = vld [vmem:[%s1 + $0x180] sm:$0xf]
      %v282 = vld [vmem:[%s1 + $0x184] sm:$0xf]
      %v283 = vld [vmem:[%s1 + $0x188] sm:$0xf]
      %v284 = vld [vmem:[%s1 + $0x18c] sm:$0xf]
      %v285 = vld [vmem:[%s1 + $0x190] sm:$0xf]
      %v286 = vld [vmem:[%s1 + $0x194] sm:$0xf]
      %v287 = vld [vmem:[%s1 + $0x198] sm:$0xf]
      %v288 = vld [vmem:[%s1 + $0x19c] sm:$0xf]
      %v289 = vld [vmem:[%s1 + $0x1a0] sm:$0xf]
      %v290 = vld [vmem:[%s1 + $0x1a4] sm:$0xf]
      %v291 = vld [vmem:[%s1 + $0x1a8] sm:$0xf]
      %v292 = vld [vmem:[%s1 + $0x1ac] sm:$0xf]
      %v293 = vld [vmem:[%s1 + $0x1b0] sm:$0xf]
      %v294 = vld [vmem:[%s1 + $0x1b4] sm:$0xf]
      %v295 = vld [vmem:[%s1 + $0x1b8] sm:$0xf]
      %v296 = vld [vmem:[%s1 + $0x1bc] sm:$0xf]
      %v297 = vld [vmem:[%s2] sm:$0x1]
      %v299 = vperm.slane %v297, 0
      %v309 = vunpack.c.l.b16 %v177
      %v310 = vunpack.c.h.b16 %v177
      %v311 = vunpack.c.l.b16 %v178
      %v312 = vunpack.c.h.b16 %v178
      %v313 = vunpack.c.l.b16 %v179
      %v314 = vunpack.c.h.b16 %v179
      %v315 = vunpack.c.l.b16 %v180
      %v316 = vunpack.c.l.b16 %v181
      %v317 = vunpack.c.h.b16 %v181
      %v318 = vunpack.c.l.b16 %v182
      %v319 = vunpack.c.h.b16 %v182
      %v320 = vunpack.c.l.b16 %v183
      %v321 = vunpack.c.h.b16 %v183
      %v322 = vunpack.c.l.b16 %v184
      %v323 = vpack.c.b16 %v316, %v309
      %v324 = vpack.c.b16 %v317, %v310
      %v325 = vpack.c.b16 %v318, %v311
      %v326 = vpack.c.b16 %v319, %v312
      %v327 = vpack.c.b16 %v320, %v313
      %v328 = vpack.c.b16 %v321, %v314
      %v329 = vpack.c.b16 %v322, %v315
      %v449 = vunpack.c.l.b16 %v185
      %v450 = vunpack.c.l.b16 %v186
      %v451 = vunpack.c.l.b16 %v187
      %v452 = vunpack.c.l.b16 %v188
      %v453 = vunpack.c.l.b16 %v189
      %v454 = vunpack.c.l.b16 %v190
      %v455 = vunpack.c.l.b16 %v191
      %v456 = vunpack.c.l.b16 %v192
      %v457 = vunpack.c.l.b16 %v193
      %v458 = vunpack.c.l.b16 %v194
      %v459 = vunpack.c.l.b16 %v195
      %v460 = vunpack.c.l.b16 %v196
      %v461 = vunpack.c.l.b16 %v197
      %v462 = vunpack.c.l.b16 %v198
      %v463 = vunpack.c.l.b16 %v199
      %v464 = vunpack.c.l.b16 %v200
      %v465 = vunpack.c.l.b16 %v201
      %v466 = vunpack.c.l.b16 %v202
      %v467 = vunpack.c.l.b16 %v203
      %v468 = vunpack.c.l.b16 %v204
      %v469 = vunpack.c.l.b16 %v205
      %v470 = vunpack.c.l.b16 %v206
      %v471 = vunpack.c.l.b16 %v207
      %v472 = vunpack.c.l.b16 %v208
      %v473 = vunpack.c.l.b16 %v209
      %v474 = vunpack.c.l.b16 %v210
      %v475 = vunpack.c.l.b16 %v211
      %v476 = vunpack.c.l.b16 %v212
      %v477 = vunpack.c.l.b16 %v213
      %v478 = vunpack.c.l.b16 %v214
      %v479 = vunpack.c.l.b16 %v215
      %v480 = vunpack.c.l.b16 %v216
      %v481 = vunpack.c.l.b16 %v217
      %v482 = vunpack.c.l.b16 %v218
      %v483 = vunpack.c.l.b16 %v219
      %v484 = vunpack.c.l.b16 %v220
      %v485 = vunpack.c.l.b16 %v221
      %v486 = vunpack.c.l.b16 %v222
      %v487 = vunpack.c.l.b16 %v223
      %v488 = vunpack.c.l.b16 %v224
      %v489 = vunpack.c.l.b16 %v225
      %v490 = vunpack.c.l.b16 %v226
      %v491 = vunpack.c.l.b16 %v227
      %v492 = vunpack.c.l.b16 %v228
      %v493 = vunpack.c.l.b16 %v229
      %v494 = vunpack.c.l.b16 %v230
      %v495 = vunpack.c.l.b16 %v231
      %v496 = vunpack.c.l.b16 %v232
      %v497 = vunpack.c.l.b16 %v233
      %v498 = vunpack.c.l.b16 %v234
      %v499 = vunpack.c.l.b16 %v235
      %v500 = vunpack.c.l.b16 %v236
      %v501 = vunpack.c.l.b16 %v237
      %v502 = vunpack.c.l.b16 %v238
      %v503 = vunpack.c.l.b16 %v239
      %v504 = vunpack.c.l.b16 %v240
      %v505 = vunpack.c.l.b16 %v241
      %v506 = vunpack.c.l.b16 %v242
      %v507 = vunpack.c.l.b16 %v243
      %v508 = vunpack.c.l.b16 %v244
      %v509 = vunpack.c.l.b16 %v245
      %v510 = vunpack.c.l.b16 %v246
      %v511 = vunpack.c.l.b16 %v247
      %v512 = vunpack.c.l.b16 %v248
      %v513 = vunpack.c.l.b16 %v249
      %v514 = vunpack.c.l.b16 %v250
      %v515 = vunpack.c.l.b16 %v251
      %v516 = vunpack.c.l.b16 %v252
      %v517 = vunpack.c.l.b16 %v253
      %v518 = vunpack.c.l.b16 %v254
      %v519 = vunpack.c.l.b16 %v255
      %v520 = vunpack.c.l.b16 %v256
      %v521 = vunpack.c.l.b16 %v257
      %v522 = vunpack.c.l.b16 %v258
      %v523 = vunpack.c.l.b16 %v259
      %v524 = vunpack.c.l.b16 %v260
      %v525 = vunpack.c.l.b16 %v261
      %v526 = vunpack.c.l.b16 %v262
      %v527 = vunpack.c.l.b16 %v263
      %v528 = vunpack.c.l.b16 %v264
      %v529 = vunpack.c.l.b16 %v265
      %v530 = vunpack.c.l.b16 %v266
      %v531 = vunpack.c.l.b16 %v267
      %v532 = vunpack.c.l.b16 %v268
      %v533 = vunpack.c.l.b16 %v269
      %v534 = vunpack.c.l.b16 %v270
      %v535 = vunpack.c.l.b16 %v271
      %v536 = vunpack.c.l.b16 %v272
      %v537 = vunpack.c.l.b16 %v273
      %v538 = vunpack.c.l.b16 %v274
      %v539 = vunpack.c.l.b16 %v275
      %v540 = vunpack.c.l.b16 %v276
      %v541 = vunpack.c.l.b16 %v277
      %v542 = vunpack.c.l.b16 %v278
      %v543 = vunpack.c.l.b16 %v279
      %v544 = vunpack.c.l.b16 %v280
      %v545 = vunpack.c.l.b16 %v281
      %v546 = vunpack.c.l.b16 %v282
      %v547 = vunpack.c.l.b16 %v283
      %v548 = vunpack.c.l.b16 %v284
      %v549 = vunpack.c.l.b16 %v285
      %v550 = vunpack.c.l.b16 %v286
      %v551 = vunpack.c.l.b16 %v287
      %v552 = vunpack.c.l.b16 %v288
      %v553 = vunpack.c.l.b16 %v289
      %v554 = vunpack.c.l.b16 %v290
      %v555 = vunpack.c.l.b16 %v291
      %v556 = vunpack.c.l.b16 %v292
      %v557 = vunpack.c.l.b16 %v293
      %v558 = vunpack.c.l.b16 %v294
      %v559 = vunpack.c.l.b16 %v295
      %v560 = vunpack.c.l.b16 %v296
      %v561 = vpack.c.b16 %v450, %v449
      %v562 = vpack.c.b16 %v452, %v451
      %v563 = vpack.c.b16 %v454, %v453
      %v564 = vpack.c.b16 %v456, %v455
      %v565 = vpack.c.b16 %v458, %v457
      %v566 = vpack.c.b16 %v460, %v459
      %v567 = vpack.c.b16 %v462, %v461
      %v568 = vpack.c.b16 %v464, %v463
      %v569 = vpack.c.b16 %v466, %v465
      %v570 = vpack.c.b16 %v468, %v467
      %v571 = vpack.c.b16 %v470, %v469
      %v572 = vpack.c.b16 %v472, %v471
      %v573 = vpack.c.b16 %v474, %v473
      %v574 = vpack.c.b16 %v476, %v475
      %v575 = vpack.c.b16 %v478, %v477
      %v576 = vpack.c.b16 %v480, %v479
      %v577 = vpack.c.b16 %v482, %v481
      %v578 = vpack.c.b16 %v484, %v483
      %v579 = vpack.c.b16 %v486, %v485
      %v580 = vpack.c.b16 %v488, %v487
      %v581 = vpack.c.b16 %v490, %v489
      %v582 = vpack.c.b16 %v492, %v491
      %v583 = vpack.c.b16 %v494, %v493
      %v584 = vpack.c.b16 %v496, %v495
      %v585 = vpack.c.b16 %v498, %v497
      %v586 = vpack.c.b16 %v500, %v499
      %v587 = vpack.c.b16 %v502, %v501
      %v588 = vpack.c.b16 %v504, %v503
      %v589 = vpack.c.b16 %v506, %v505
      %v590 = vpack.c.b16 %v508, %v507
      %v591 = vpack.c.b16 %v510, %v509
      %v592 = vpack.c.b16 %v512, %v511
      %v593 = vpack.c.b16 %v514, %v513
      %v594 = vpack.c.b16 %v516, %v515
      %v595 = vpack.c.b16 %v518, %v517
      %v596 = vpack.c.b16 %v520, %v519
      %v597 = vpack.c.b16 %v522, %v521
      %v598 = vpack.c.b16 %v524, %v523
      %v599 = vpack.c.b16 %v526, %v525
      %v600 = vpack.c.b16 %v528, %v527
      %v601 = vpack.c.b16 %v530, %v529
      %v602 = vpack.c.b16 %v532, %v531
      %v603 = vpack.c.b16 %v534, %v533
      %v604 = vpack.c.b16 %v536, %v535
      %v605 = vpack.c.b16 %v538, %v537
      %v606 = vpack.c.b16 %v540, %v539
      %v607 = vpack.c.b16 %v542, %v541
      %v608 = vpack.c.b16 %v544, %v543
      %v609 = vpack.c.b16 %v546, %v545
      %v610 = vpack.c.b16 %v548, %v547
      %v611 = vpack.c.b16 %v550, %v549
      %v612 = vpack.c.b16 %v552, %v551
      %v613 = vpack.c.b16 %v554, %v553
      %v614 = vpack.c.b16 %v556, %v555
      %v615 = vpack.c.b16 %v558, %v557
      %v616 = vpack.c.b16 %v560, %v559
      %673 = vmatpush.bf16.msra.mxu0 %v568
      %674 = vmatpush.bf16.msra.mxu0 %v567
      %675 = vmatpush.bf16.msra.mxu0 %v566
      %676 = vmatpush.bf16.msra.mxu0 %v565
      %677 = vmatpush.bf16.msra.mxu0 %v564
      %678 = vmatpush.bf16.msra.mxu0 %v563
      %679 = vmatpush.bf16.msra.mxu0 %v562
      %680 = vmatpush.bf16.msra.mxu0 %v561
      %681 = vmatmul.bf16.gmra.mxu0 %v323
      %v682 = vpop.f32.mrf.mxu0
      %v683 = vadd.f32 %v299, %v682
      %v684 = vpop.f32.mrf.mxu0
      %v685 = vadd.f32 %v299, %v684
      %686 = vdwg.mxu0
      %687 = vmatpush.bf16.msra.mxu0 %v576
      %688 = vmatpush.bf16.msra.mxu0 %v575
      %689 = vmatpush.bf16.msra.mxu0 %v574
      %690 = vmatpush.bf16.msra.mxu0 %v573
      %691 = vmatpush.bf16.msra.mxu0 %v572
      %692 = vmatpush.bf16.msra.mxu0 %v571
      %693 = vmatpush.bf16.msra.mxu0 %v570
      %694 = vmatpush.bf16.msra.mxu0 %v569
      %695 = vmatmul.bf16.gmra.mxu0 %v324
      %v696 = vpop.f32.mrf.mxu0
      %v697 = vadd.f32 %v683, %v696
      %v698 = vpop.f32.mrf.mxu0
      %v699 = vadd.f32 %v685, %v698
      %700 = vdwg.mxu0
      %701 = vmatpush.bf16.msra.mxu0 %v584
      %702 = vmatpush.bf16.msra.mxu0 %v583
      %703 = vmatpush.bf16.msra.mxu0 %v582
      %704 = vmatpush.bf16.msra.mxu0 %v581
      %705 = vmatpush.bf16.msra.mxu0 %v580
      %706 = vmatpush.bf16.msra.mxu0 %v579
      %707 = vmatpush.bf16.msra.mxu0 %v578
      %708 = vmatpush.bf16.msra.mxu0 %v577
      %709 = vmatmul.bf16.gmra.mxu0 %v325
      %v710 = vpop.f32.mrf.mxu0
      %v711 = vadd.f32 %v697, %v710
      %v712 = vpop.f32.mrf.mxu0
      %v713 = vadd.f32 %v699, %v712
      %714 = vdwg.mxu0
      %715 = vmatpush.bf16.msra.mxu0 %v592
      %716 = vmatpush.bf16.msra.mxu0 %v591
      %717 = vmatpush.bf16.msra.mxu0 %v590
      %718 = vmatpush.bf16.msra.mxu0 %v589
      %719 = vmatpush.bf16.msra.mxu0 %v588
      %720 = vmatpush.bf16.msra.mxu0 %v587
      %721 = vmatpush.bf16.msra.mxu0 %v586
      %722 = vmatpush.bf16.msra.mxu0 %v585
      %723 = vmatmul.bf16.gmra.mxu0 %v326
      %v724 = vpop.f32.mrf.mxu0
      %v725 = vadd.f32 %v711, %v724
      %v726 = vpop.f32.mrf.mxu0
      %v727 = vadd.f32 %v713, %v726
      %728 = vdwg.mxu0
      %729 = vmatpush.bf16.msra.mxu0 %v600
      %730 = vmatpush.bf16.msra.mxu0 %v599
      %731 = vmatpush.bf16.msra.mxu0 %v598
      %732 = vmatpush.bf16.msra.mxu0 %v597
      %733 = vmatpush.bf16.msra.mxu0 %v596
      %734 = vmatpush.bf16.msra.mxu0 %v595
      %735 = vmatpush.bf16.msra.mxu0 %v594
      %736 = vmatpush.bf16.msra.mxu0 %v593
      %737 = vmatmul.bf16.gmra.mxu0 %v327
      %v738 = vpop.f32.mrf.mxu0
      %v739 = vadd.f32 %v725, %v738
      %v740 = vpop.f32.mrf.mxu0
      %v741 = vadd.f32 %v727, %v740
      %742 = vdwg.mxu0
      %743 = vmatpush.bf16.msra.mxu0 %v608
      %744 = vmatpush.bf16.msra.mxu0 %v607
      %745 = vmatpush.bf16.msra.mxu0 %v606
      %746 = vmatpush.bf16.msra.mxu0 %v605
      %747 = vmatpush.bf16.msra.mxu0 %v604
      %748 = vmatpush.bf16.msra.mxu0 %v603
      %749 = vmatpush.bf16.msra.mxu0 %v602
      %750 = vmatpush.bf16.msra.mxu0 %v601
      %751 = vmatmul.bf16.gmra.mxu0 %v328
      %v752 = vpop.f32.mrf.mxu0
      %v753 = vadd.f32 %v739, %v752
      %v754 = vpop.f32.mrf.mxu0
      %v755 = vadd.f32 %v741, %v754
      %756 = vdwg.mxu0
      %757 = vmatpush.bf16.msra.mxu0 %v616
      %758 = vmatpush.bf16.msra.mxu0 %v615
      %759 = vmatpush.bf16.msra.mxu0 %v614
      %760 = vmatpush.bf16.msra.mxu0 %v613
      %761 = vmatpush.bf16.msra.mxu0 %v612
      %762 = vmatpush.bf16.msra.mxu0 %v611
      %763 = vmatpush.bf16.msra.mxu0 %v610
      %764 = vmatpush.bf16.msra.mxu0 %v609
      %765 = vmatmul.bf16.gmra.mxu0 %v329
      %v766 = vpop.f32.mrf.mxu0
      %v767 = vadd.f32 %v753, %v766
      %v768 = vpop.f32.mrf.mxu0
      %v769 = vadd.f32 %v755, %v768
      %770 = vdwg.mxu0
      %vm771 = vcmp.gt.f32.partialorder %v767, 0.0
      %vm772 = vcmp.gt.f32.partialorder %v769, 0.0
      %v773 = vmul.f32 %v767, 0.2
      %v774 = vmul.f32 %v769, 0.2
      %v775 = vsel %vm771, %v767, %v773
      %v776 = vsel %vm772, %v769, %v774
      %777 = vst [vmem:[%s175] sm:$0xff] %v775
      %778 = vst [vmem:[%s175 + $0x8] sm:$0xff] %v776
      %s779 = smul.u32 2, %s14
      %p780 = scmp.lt.s32.totalorder %s779, 3
      %s781 = scalar_select %p780, %s779, 3
      %s782 = smul.addr %s781, 8
      %s783 = scalar_lea.vmem %s3, %s782
      // Predicated region
      $region33: #{_discriminator_forward.6} parent=31 // pred_check
        %p784 = pneg %p100
      $region34: #{_discriminator_forward.6} parent=31 // pred_check_branch
        %786 = sbr.rel (%p784) target = $region36
      $region35: #{_discriminator_forward.6} parent=31 // pred_region
        %s787 = smul.u32 2, %s14
      $region36: #{_discriminator_forward.6} parent=31 // pred_fallthru
        _
    $region32: #{_discriminator_forward.6} parent=5 // pred_fallthru
      _
    %p788 = scmp.le.s32.totalorder 2, %s9
    // Predicated region
    $region37: #{_discriminator_forward.6} parent=5 // pred_check
      %p789 = pneg %p788
    $region38: #{_discriminator_forward.6} parent=5 // pred_check_branch
      %791 = sbr.rel (%p789) target = $region40
    $region39: #{_discriminator_forward.6} parent=5 // pred_region
      %s792 = ssub.s32 %s9, 2
      // Predicated region
      $region41: #{_discriminator_forward.6} parent=39 // pred_check
        %p793 = pneg %p106
      $region42: #{_discriminator_forward.6} parent=39 // pred_check_branch
        %795 = sbr.rel (%p793) target = $region44
      $region43: #{_discriminator_forward.6} parent=39 // pred_region
        %s796 = smul.u32 2, %s15
        %p797 = scmp.lt.s32.totalorder %s796, 3
        %s798 = scalar_select %p797, %s796, 3
        %s799 = smul.addr %s798, 8
        %s800 = scalar_lea.vmem %s3, %s799
      $region44: #{_discriminator_forward.6} parent=39 // pred_fallthru
        _
    $region40: #{_discriminator_forward.6} parent=5 // pred_fallthru
      _
  $region6: #{_discriminator_forward.6} parent=0 // loop_footer
    %s13 = sadd.s32 1, %s9
  $region7: #{_discriminator_forward.6} parent=0 // loop_footer_branch
    %8 = sbr.rel target = $region3
  $region8: #{_discriminator_forward.6} parent=0 // loop_exit
    _

// kernel: _discriminator_forward.7
$region0: #{_discriminator_forward.7}
  #allocation0 [shape = 'u32[]', space=smem, size = 0x4, offset = 0x4, fixed_abs, tag = 'smem constant byte address 0x4 - core index']
  #allocation1 [shape = 'u32[72,128]{1,0:T(1,128)}', space=vmem, size = 0x9000, scoped, tag = 'internal scratch']
  %s0 = inlined_call_operand.vmem [shape: bf16[8,1024], index: 0, kind: input, shape index: {}]
  %s1 = inlined_call_operand.vmem [shape: bf16[1024,128], index: 1, kind: input, shape index: {}]
  %s2 = inlined_call_operand.vmem [shape: f32[1,128], index: 2, kind: input, shape index: {}]
  %s3 = inlined_call_operand.vmem [shape: f32[8,128], index: 3, kind: output, shape index: {}]
  %s4 = sld [smem:[#allocation0]]
  $region22: #{_discriminator_forward.7} parent=0
    _
  %s6 = ssub.s32 1, %s4
  %s7 = scalar_select 0, %s6, %s4
  // Predicated region
  $region2: #{_discriminator_forward.7} parent=0 // pred_check
    _
  $region3: #{_discriminator_forward.7} parent=0 // pred_check_branch
    %9 = sbr.rel (0) target = $region5
  $region4: #{_discriminator_forward.7} parent=0 // pred_region
    _
  $region5: #{_discriminator_forward.7} parent=0 // pred_fallthru
    _
  // Predicated region
  $region6: #{_discriminator_forward.7} parent=0 // pred_check
    _
  $region7: #{_discriminator_forward.7} parent=0 // pred_check_branch
    %11 = sbr.rel (0) target = $region9
  $region8: #{_discriminator_forward.7} parent=0 // pred_region
    _
  $region9: #{_discriminator_forward.7} parent=0 // pred_fallthru
    _
  // Predicated region
  $region10: #{_discriminator_forward.7} parent=0 // pred_check
    _
  $region11: #{_discriminator_forward.7} parent=0 // pred_check_branch
    %13 = sbr.rel (0) target = $region13
  $region12: #{_discriminator_forward.7} parent=0 // pred_region
    _
  $region13: #{_discriminator_forward.7} parent=0 // pred_fallthru
    _
  %v14 = vld [vmem:[%s0] sm:$0xff]
  %v15 = vld [vmem:[%s0 + $0x8] sm:$0xff]
  %v16 = vld [vmem:[%s0 + $0x10] sm:$0xff]
  %v17 = vld [vmem:[%s0 + $0x18] sm:$0xff]
  %v18 = vld [vmem:[%s1] sm:$0xf]
  %v19 = vld [vmem:[%s1 + $0x4] sm:$0xf]
  %v20 = vld [vmem:[%s1 + $0x8] sm:$0xf]
  %v21 = vld [vmem:[%s1 + $0xc] sm:$0xf]
  %v22 = vld [vmem:[%s1 + $0x10] sm:$0xf]
  %v23 = vld [vmem:[%s1 + $0x14] sm:$0xf]
  %v24 = vld [vmem:[%s1 + $0x18] sm:$0xf]
  %v25 = vld [vmem:[%s1 + $0x1c] sm:$0xf]
  %v26 = vld [vmem:[%s1 + $0x20] sm:$0xf]
  %v27 = vld [vmem:[%s1 + $0x24] sm:$0xf]
  %v28 = vld [vmem:[%s1 + $0x28] sm:$0xf]
  %v29 = vld [vmem:[%s1 + $0x2c] sm:$0xf]
  %v30 = vld [vmem:[%s1 + $0x30] sm:$0xf]
  %v31 = vld [vmem:[%s1 + $0x34] sm:$0xf]
  %v32 = vld [vmem:[%s1 + $0x38] sm:$0xf]
  %v33 = vld [vmem:[%s1 + $0x3c] sm:$0xf]
  %v34 = vld [vmem:[%s1 + $0x40] sm:$0xf]
  %v35 = vld [vmem:[%s1 + $0x44] sm:$0xf]
  %v36 = vld [vmem:[%s1 + $0x48] sm:$0xf]
  %v37 = vld [vmem:[%s1 + $0x4c] sm:$0xf]
  %v38 = vld [vmem:[%s1 + $0x50] sm:$0xf]
  %v39 = vld [vmem:[%s1 + $0x54] sm:$0xf]
  %v40 = vld [vmem:[%s1 + $0x58] sm:$0xf]
  %v41 = vld [vmem:[%s1 + $0x5c] sm:$0xf]
  %v42 = vld [vmem:[%s1 + $0x60] sm:$0xf]
  %v43 = vld [vmem:[%s1 + $0x64] sm:$0xf]
  %v44 = vld [vmem:[%s1 + $0x68] sm:$0xf]
  %v45 = vld [vmem:[%s1 + $0x6c] sm:$0xf]
  %v46 = vld [vmem:[%s1 + $0x70] sm:$0xf]
  %v47 = vld [vmem:[%s1 + $0x74] sm:$0xf]
  %v48 = vld [vmem:[%s1 + $0x78] sm:$0xf]
  %v49 = vld [vmem:[%s1 + $0x7c] sm:$0xf]
  %v50 = vld [vmem:[%s1 + $0x80] sm:$0xf]
  %v51 = vld [vmem:[%s1 + $0x84] sm:$0xf]
  %v52 = vld [vmem:[%s1 + $0x88] sm:$0xf]
  %v53 = vld [vmem:[%s1 + $0x8c] sm:$0xf]
  %v54 = vld [vmem:[%s1 + $0x90] sm:$0xf]
  %v55 = vld [vmem:[%s1 + $0x94] sm:$0xf]
  %v56 = vld [vmem:[%s1 + $0x98] sm:$0xf]
  %v57 = vld [vmem:[%s1 + $0x9c] sm:$0xf]
  %v58 = vld [vmem:[%s1 + $0xa0] sm:$0xf]
  %v59 = vld [vmem:[%s1 + $0xa4] sm:$0xf]
  %v60 = vld [vmem:[%s1 + $0xa8] sm:$0xf]
  %v61 = vld [vmem:[%s1 + $0xac] sm:$0xf]
  %v62 = vld [vmem:[%s1 + $0xb0] sm:$0xf]
  %v63 = vld [vmem:[%s1 + $0xb4] sm:$0xf]
  %v64 = vld [vmem:[%s1 + $0xb8] sm:$0xf]
  %v65 = vld [vmem:[%s1 + $0xbc] sm:$0xf]
  %v66 = vld [vmem:[%s1 + $0xc0] sm:$0xf]
  %v67 = vld [vmem:[%s1 + $0xc4] sm:$0xf]
  %v68 = vld [vmem:[%s1 + $0xc8] sm:$0xf]
  %v69 = vld [vmem:[%s1 + $0xcc] sm:$0xf]
  %v70 = vld [vmem:[%s1 + $0xd0] sm:$0xf]
  %v71 = vld [vmem:[%s1 + $0xd4] sm:$0xf]
  %v72 = vld [vmem:[%s1 + $0xd8] sm:$0xf]
  %v73 = vld [vmem:[%s1 + $0xdc] sm:$0xf]
  %v74 = vld [vmem:[%s1 + $0xe0] sm:$0xf]
  %v75 = vld [vmem:[%s1 + $0xe4] sm:$0xf]
  %v76 = vld [vmem:[%s1 + $0xe8] sm:$0xf]
  %v77 = vld [vmem:[%s1 + $0xec] sm:$0xf]
  %v78 = vld [vmem:[%s1 + $0xf0] sm:$0xf]
  %v79 = vld [vmem:[%s1 + $0xf4] sm:$0xf]
  %v80 = vld [vmem:[%s1 + $0xf8] sm:$0xf]
  %v81 = vld [vmem:[%s1 + $0xfc] sm:$0xf]
  %v82 = vld [vmem:[%s1 + $0x100] sm:$0xf]
  %v83 = vld [vmem:[%s1 + $0x104] sm:$0xf]
  %v84 = vld [vmem:[%s1 + $0x108] sm:$0xf]
  %v85 = vld [vmem:[%s1 + $0x10c] sm:$0xf]
  %v86 = vld [vmem:[%s1 + $0x110] sm:$0xf]
  %v87 = vld [vmem:[%s1 + $0x114] sm:$0xf]
  %v88 = vld [vmem:[%s1 + $0x118] sm:$0xf]
  %v89 = vld [vmem:[%s1 + $0x11c] sm:$0xf]
  %v90 = vld [vmem:[%s1 + $0x120] sm:$0xf]
  %v91 = vld [vmem:[%s1 + $0x124] sm:$0xf]
  %v92 = vld [vmem:[%s1 + $0x128] sm:$0xf]
  %v93 = vld [vmem:[%s1 + $0x12c] sm:$0xf]
  %v94 = vld [vmem:[%s1 + $0x130] sm:$0xf]
  %v95 = vld [vmem:[%s1 + $0x134] sm:$0xf]
  %v96 = vld [vmem:[%s1 + $0x138] sm:$0xf]
  %v97 = vld [vmem:[%s1 + $0x13c] sm:$0xf]
  %v98 = vld [vmem:[%s1 + $0x140] sm:$0xf]
  %v99 = vld [vmem:[%s1 + $0x144] sm:$0xf]
  %v100 = vld [vmem:[%s1 + $0x148] sm:$0xf]
  %v101 = vld [vmem:[%s1 + $0x14c] sm:$0xf]
  %v102 = vld [vmem:[%s1 + $0x150] sm:$0xf]
  %v103 = vld [vmem:[%s1 + $0x154] sm:$0xf]
  %v104 = vld [vmem:[%s1 + $0x158] sm:$0xf]
  %v105 = vld [vmem:[%s1 + $0x15c] sm:$0xf]
  %v106 = vld [vmem:[%s1 + $0x160] sm:$0xf]
  %v107 = vld [vmem:[%s1 + $0x164] sm:$0xf]
  %v108 = vld [vmem:[%s1 + $0x168] sm:$0xf]
  %v109 = vld [vmem:[%s1 + $0x16c] sm:$0xf]
  %v110 = vld [vmem:[%s1 + $0x170] sm:$0xf]
  %v111 = vld [vmem:[%s1 + $0x174] sm:$0xf]
  %v112 = vld [vmem:[%s1 + $0x178] sm:$0xf]
  %v113 = vld [vmem:[%s1 + $0x17c] sm:$0xf]
  %v114 = vld [vmem:[%s1 + $0x180] sm:$0xf]
  %v115 = vld [vmem:[%s1 + $0x184] sm:$0xf]
  %v116 = vld [vmem:[%s1 + $0x188] sm:$0xf]
  %v117 = vld [vmem:[%s1 + $0x18c] sm:$0xf]
  %v118 = vld [vmem:[%s1 + $0x190] sm:$0xf]
  %v119 = vld [vmem:[%s1 + $0x194] sm:$0xf]
  %v120 = vld [vmem:[%s1 + $0x198] sm:$0xf]
  %v121 = vld [vmem:[%s1 + $0x19c] sm:$0xf]
  %v122 = vld [vmem:[%s1 + $0x1a0] sm:$0xf]
  %v123 = vld [vmem:[%s1 + $0x1a4] sm:$0xf]
  %v124 = vld [vmem:[%s1 + $0x1a8] sm:$0xf]
  %v125 = vld [vmem:[%s1 + $0x1ac] sm:$0xf]
  %v126 = vld [vmem:[%s1 + $0x1b0] sm:$0xf]
  %v127 = vld [vmem:[%s1 + $0x1b4] sm:$0xf]
  %v128 = vld [vmem:[%s1 + $0x1b8] sm:$0xf]
  %v129 = vld [vmem:[%s1 + $0x1bc] sm:$0xf]
  %v130 = vld [vmem:[%s1 + $0x1c0] sm:$0xf]
  %v131 = vld [vmem:[%s1 + $0x1c4] sm:$0xf]
  %v132 = vld [vmem:[%s1 + $0x1c8] sm:$0xf]
  %v133 = vld [vmem:[%s1 + $0x1cc] sm:$0xf]
  %v134 = vld [vmem:[%s1 + $0x1d0] sm:$0xf]
  %v135 = vld [vmem:[%s1 + $0x1d4] sm:$0xf]
  %v136 = vld [vmem:[%s1 + $0x1d8] sm:$0xf]
  %v137 = vld [vmem:[%s1 + $0x1dc] sm:$0xf]
  %v138 = vld [vmem:[%s1 + $0x1e0] sm:$0xf]
  %v139 = vld [vmem:[%s1 + $0x1e4] sm:$0xf]
  %v140 = vld [vmem:[%s1 + $0x1e8] sm:$0xf]
  %v141 = vld [vmem:[%s1 + $0x1ec] sm:$0xf]
  %v142 = vld [vmem:[%s1 + $0x1f0] sm:$0xf]
  %v143 = vld [vmem:[%s1 + $0x1f4] sm:$0xf]
  %v144 = vld [vmem:[%s1 + $0x1f8] sm:$0xf]
  %v145 = vld [vmem:[%s1 + $0x1fc] sm:$0xf]
  %v146 = vld [vmem:[%s2] sm:$0x1]
  %v148 = vperm.slane %v146, 0
  %v154 = vunpack.c.l.b16 %v14
  %v155 = vunpack.c.h.b16 %v14
  %v156 = vunpack.c.l.b16 %v15
  %v157 = vunpack.c.h.b16 %v15
  %v158 = vunpack.c.l.b16 %v16
  %v159 = vunpack.c.h.b16 %v16
  %v160 = vunpack.c.l.b16 %v17
  %v161 = vunpack.c.h.b16 %v17
  %v162 = vpack.c.b16 %v154, %v154
  %v163 = vpack.c.b16 %v155, %v155
  %v164 = vpack.c.b16 %v156, %v156
  %v165 = vpack.c.b16 %v157, %v157
  %v166 = vpack.c.b16 %v158, %v158
  %v167 = vpack.c.b16 %v159, %v159
  %v168 = vpack.c.b16 %v160, %v160
  %v169 = vpack.c.b16 %v161, %v161
  %v306 = vunpack.c.l.b16 %v18
  %v307 = vunpack.c.l.b16 %v19
  %v308 = vunpack.c.l.b16 %v20
  %v309 = vunpack.c.l.b16 %v21
  %v310 = vunpack.c.l.b16 %v22
  %v311 = vunpack.c.l.b16 %v23
  %v312 = vunpack.c.l.b16 %v24
  %v313 = vunpack.c.l.b16 %v25
  %v314 = vunpack.c.l.b16 %v26
  %v315 = vunpack.c.l.b16 %v27
  %v316 = vunpack.c.l.b16 %v28
  %v317 = vunpack.c.l.b16 %v29
  %v318 = vunpack.c.l.b16 %v30
  %v319 = vunpack.c.l.b16 %v31
  %v320 = vunpack.c.l.b16 %v32
  %v321 = vunpack.c.l.b16 %v33
  %v322 = vunpack.c.l.b16 %v34
  %v323 = vunpack.c.l.b16 %v35
  %v324 = vunpack.c.l.b16 %v36
  %v325 = vunpack.c.l.b16 %v37
  %v326 = vunpack.c.l.b16 %v38
  %v327 = vunpack.c.l.b16 %v39
  %v328 = vunpack.c.l.b16 %v40
  %v329 = vunpack.c.l.b16 %v41
  %v330 = vunpack.c.l.b16 %v42
  %v331 = vunpack.c.l.b16 %v43
  %v332 = vunpack.c.l.b16 %v44
  %v333 = vunpack.c.l.b16 %v45
  %v334 = vunpack.c.l.b16 %v46
  %v335 = vunpack.c.l.b16 %v47
  %v336 = vunpack.c.l.b16 %v48
  %v337 = vunpack.c.l.b16 %v49
  %v338 = vunpack.c.l.b16 %v50
  %v339 = vunpack.c.l.b16 %v51
  %v340 = vunpack.c.l.b16 %v52
  %v341 = vunpack.c.l.b16 %v53
  %v342 = vunpack.c.l.b16 %v54
  %v343 = vunpack.c.l.b16 %v55
  %v344 = vunpack.c.l.b16 %v56
  %v345 = vunpack.c.l.b16 %v57
  %v346 = vunpack.c.l.b16 %v58
  %v347 = vunpack.c.l.b16 %v59
  %v348 = vunpack.c.l.b16 %v60
  %v349 = vunpack.c.l.b16 %v61
  %v350 = vunpack.c.l.b16 %v62
  %v351 = vunpack.c.l.b16 %v63
  %v352 = vunpack.c.l.b16 %v64
  %v353 = vunpack.c.l.b16 %v65
  %v354 = vunpack.c.l.b16 %v66
  %v355 = vunpack.c.l.b16 %v67
  %v356 = vunpack.c.l.b16 %v68
  %v357 = vunpack.c.l.b16 %v69
  %v358 = vunpack.c.l.b16 %v70
  %v359 = vunpack.c.l.b16 %v71
  %v360 = vunpack.c.l.b16 %v72
  %v361 = vunpack.c.l.b16 %v73
  %v362 = vunpack.c.l.b16 %v74
  %v363 = vunpack.c.l.b16 %v75
  %v364 = vunpack.c.l.b16 %v76
  %v365 = vunpack.c.l.b16 %v77
  %v366 = vunpack.c.l.b16 %v78
  %v367 = vunpack.c.l.b16 %v79
  %v368 = vunpack.c.l.b16 %v80
  %v369 = vunpack.c.l.b16 %v81
  %v370 = vunpack.c.l.b16 %v82
  %v371 = vunpack.c.l.b16 %v83
  %v372 = vunpack.c.l.b16 %v84
  %v373 = vunpack.c.l.b16 %v85
  %v374 = vunpack.c.l.b16 %v86
  %v375 = vunpack.c.l.b16 %v87
  %v376 = vunpack.c.l.b16 %v88
  %v377 = vunpack.c.l.b16 %v89
  %v378 = vunpack.c.l.b16 %v90
  %v379 = vunpack.c.l.b16 %v91
  %v380 = vunpack.c.l.b16 %v92
  %v381 = vunpack.c.l.b16 %v93
  %v382 = vunpack.c.l.b16 %v94
  %v383 = vunpack.c.l.b16 %v95
  %v384 = vunpack.c.l.b16 %v96
  %v385 = vunpack.c.l.b16 %v97
  %v386 = vunpack.c.l.b16 %v98
  %v387 = vunpack.c.l.b16 %v99
  %v388 = vunpack.c.l.b16 %v100
  %v389 = vunpack.c.l.b16 %v101
  %v390 = vunpack.c.l.b16 %v102
  %v391 = vunpack.c.l.b16 %v103
  %v392 = vunpack.c.l.b16 %v104
  %v393 = vunpack.c.l.b16 %v105
  %v394 = vunpack.c.l.b16 %v106
  %v395 = vunpack.c.l.b16 %v107
  %v396 = vunpack.c.l.b16 %v108
  %v397 = vunpack.c.l.b16 %v109
  %v398 = vunpack.c.l.b16 %v110
  %v399 = vunpack.c.l.b16 %v111
  %v400 = vunpack.c.l.b16 %v112
  %v401 = vunpack.c.l.b16 %v113
  %v402 = vunpack.c.l.b16 %v114
  %v403 = vunpack.c.l.b16 %v115
  %v404 = vunpack.c.l.b16 %v116
  %v405 = vunpack.c.l.b16 %v117
  %v406 = vunpack.c.l.b16 %v118
  %v407 = vunpack.c.l.b16 %v119
  %v408 = vunpack.c.l.b16 %v120
  %v409 = vunpack.c.l.b16 %v121
  %v410 = vunpack.c.l.b16 %v122
  %v411 = vunpack.c.l.b16 %v123
  %v412 = vunpack.c.l.b16 %v124
  %v413 = vunpack.c.l.b16 %v125
  %v414 = vunpack.c.l.b16 %v126
  %v415 = vunpack.c.l.b16 %v127
  %v416 = vunpack.c.l.b16 %v128
  %v417 = vunpack.c.l.b16 %v129
  %v418 = vunpack.c.l.b16 %v130
  %v419 = vunpack.c.l.b16 %v131
  %v420 = vunpack.c.l.b16 %v132
  %v421 = vunpack.c.l.b16 %v133
  %v422 = vunpack.c.l.b16 %v134
  %v423 = vunpack.c.l.b16 %v135
  %v424 = vunpack.c.l.b16 %v136
  %v425 = vunpack.c.l.b16 %v137
  %v426 = vunpack.c.l.b16 %v138
  %v427 = vunpack.c.l.b16 %v139
  %v428 = vunpack.c.l.b16 %v140
  %v429 = vunpack.c.l.b16 %v141
  %v430 = vunpack.c.l.b16 %v142
  %v431 = vunpack.c.l.b16 %v143
  %v432 = vunpack.c.l.b16 %v144
  %v433 = vunpack.c.l.b16 %v145
  %v434 = vpack.c.b16 %v307, %v306
  %v435 = vpack.c.b16 %v309, %v308
  %v436 = vpack.c.b16 %v311, %v310
  %v437 = vpack.c.b16 %v313, %v312
  %v438 = vpack.c.b16 %v315, %v314
  %v439 = vpack.c.b16 %v317, %v316
  %v440 = vpack.c.b16 %v319, %v318
  %v441 = vpack.c.b16 %v321, %v320
  %v442 = vpack.c.b16 %v323, %v322
  %v443 = vpack.c.b16 %v325, %v324
  %v444 = vpack.c.b16 %v327, %v326
  %v445 = vpack.c.b16 %v329, %v328
  %v446 = vpack.c.b16 %v331, %v330
  %v447 = vpack.c.b16 %v333, %v332
  %v448 = vpack.c.b16 %v335, %v334
  %v449 = vpack.c.b16 %v337, %v336
  %v450 = vpack.c.b16 %v339, %v338
  %v451 = vpack.c.b16 %v341, %v340
  %v452 = vpack.c.b16 %v343, %v342
  %v453 = vpack.c.b16 %v345, %v344
  %v454 = vpack.c.b16 %v347, %v346
  %v455 = vpack.c.b16 %v349, %v348
  %v456 = vpack.c.b16 %v351, %v350
  %v457 = vpack.c.b16 %v353, %v352
  %v458 = vpack.c.b16 %v355, %v354
  %v459 = vpack.c.b16 %v357, %v356
  %v460 = vpack.c.b16 %v359, %v358
  %v461 = vpack.c.b16 %v361, %v360
  %v462 = vpack.c.b16 %v363, %v362
  %v463 = vpack.c.b16 %v365, %v364
  %v464 = vpack.c.b16 %v367, %v366
  %v465 = vpack.c.b16 %v369, %v368
  %v466 = vpack.c.b16 %v371, %v370
  %v467 = vpack.c.b16 %v373, %v372
  %v468 = vpack.c.b16 %v375, %v374
  %v469 = vpack.c.b16 %v377, %v376
  %v470 = vpack.c.b16 %v379, %v378
  %v471 = vpack.c.b16 %v381, %v380
  %v472 = vpack.c.b16 %v383, %v382
  %v473 = vpack.c.b16 %v385, %v384
  %v474 = vpack.c.b16 %v387, %v386
  %v475 = vpack.c.b16 %v389, %v388
  %v476 = vpack.c.b16 %v391, %v390
  %v477 = vpack.c.b16 %v393, %v392
  %v478 = vpack.c.b16 %v395, %v394
  %v479 = vpack.c.b16 %v397, %v396
  %v480 = vpack.c.b16 %v399, %v398
  %v481 = vpack.c.b16 %v401, %v400
  %v482 = vpack.c.b16 %v403, %v402
  %v483 = vpack.c.b16 %v405, %v404
  %v484 = vpack.c.b16 %v407, %v406
  %v485 = vpack.c.b16 %v409, %v408
  %v486 = vpack.c.b16 %v411, %v410
  %v487 = vpack.c.b16 %v413, %v412
  %v488 = vpack.c.b16 %v415, %v414
  %v489 = vpack.c.b16 %v417, %v416
  %v490 = vpack.c.b16 %v419, %v418
  %v491 = vpack.c.b16 %v421, %v420
  %v492 = vpack.c.b16 %v423, %v422
  %v493 = vpack.c.b16 %v425, %v424
  %v494 = vpack.c.b16 %v427, %v426
  %v495 = vpack.c.b16 %v429, %v428
  %v496 = vpack.c.b16 %v431, %v430
  %v497 = vpack.c.b16 %v433, %v432
  %562 = vmatpush.bf16.msra.mxu0 %v441
  %563 = vmatpush.bf16.msra.mxu0 %v440
  %564 = vmatpush.bf16.msra.mxu0 %v439
  %565 = vmatpush.bf16.msra.mxu0 %v438
  %566 = vmatpush.bf16.msra.mxu0 %v437
  %567 = vmatpush.bf16.msra.mxu0 %v436
  %568 = vmatpush.bf16.msra.mxu0 %v435
  %569 = vmatpush.bf16.msra.mxu0 %v434
  %570 = vmatmul.bf16.gmra.mxu0 %v162
  %v571 = vpop.f32.mrf.mxu0
  %v572 = vadd.f32 %v148, %v571
  %v573 = vpop.f32.mrf.mxu0
  %574 = vdwg.mxu0
  %575 = vmatpush.bf16.msra.mxu0 %v449
  %576 = vmatpush.bf16.msra.mxu0 %v448
  %577 = vmatpush.bf16.msra.mxu0 %v447
  %578 = vmatpush.bf16.msra.mxu0 %v446
  %579 = vmatpush.bf16.msra.mxu0 %v445
  %580 = vmatpush.bf16.msra.mxu0 %v444
  %581 = vmatpush.bf16.msra.mxu0 %v443
  %582 = vmatpush.bf16.msra.mxu0 %v442
  %583 = vmatmul.bf16.gmra.mxu0 %v163
  %v584 = vpop.f32.mrf.mxu0
  %v585 = vadd.f32 %v572, %v584
  %v586 = vpop.f32.mrf.mxu0
  %587 = vdwg.mxu0
  %588 = vmatpush.bf16.msra.mxu0 %v457
  %589 = vmatpush.bf16.msra.mxu0 %v456
  %590 = vmatpush.bf16.msra.mxu0 %v455
  %591 = vmatpush.bf16.msra.mxu0 %v454
  %592 = vmatpush.bf16.msra.mxu0 %v453
  %593 = vmatpush.bf16.msra.mxu0 %v452
  %594 = vmatpush.bf16.msra.mxu0 %v451
  %595 = vmatpush.bf16.msra.mxu0 %v450
  %596 = vmatmul.bf16.gmra.mxu0 %v164
  %v597 = vpop.f32.mrf.mxu0
  %v598 = vadd.f32 %v585, %v597
  %v599 = vpop.f32.mrf.mxu0
  %600 = vdwg.mxu0
  %601 = vmatpush.bf16.msra.mxu0 %v465
  %602 = vmatpush.bf16.msra.mxu0 %v464
  %603 = vmatpush.bf16.msra.mxu0 %v463
  %604 = vmatpush.bf16.msra.mxu0 %v462
  %605 = vmatpush.bf16.msra.mxu0 %v461
  %606 = vmatpush.bf16.msra.mxu0 %v460
  %607 = vmatpush.bf16.msra.mxu0 %v459
  %608 = vmatpush.bf16.msra.mxu0 %v458
  %609 = vmatmul.bf16.gmra.mxu0 %v165
  %v610 = vpop.f32.mrf.mxu0
  %v611 = vadd.f32 %v598, %v610
  %v612 = vpop.f32.mrf.mxu0
  %613 = vdwg.mxu0
  %614 = vmatpush.bf16.msra.mxu0 %v473
  %615 = vmatpush.bf16.msra.mxu0 %v472
  %616 = vmatpush.bf16.msra.mxu0 %v471
  %617 = vmatpush.bf16.msra.mxu0 %v470
  %618 = vmatpush.bf16.msra.mxu0 %v469
  %619 = vmatpush.bf16.msra.mxu0 %v468
  %620 = vmatpush.bf16.msra.mxu0 %v467
  %621 = vmatpush.bf16.msra.mxu0 %v466
  %622 = vmatmul.bf16.gmra.mxu0 %v166
  %v623 = vpop.f32.mrf.mxu0
  %v624 = vadd.f32 %v611, %v623
  %v625 = vpop.f32.mrf.mxu0
  %626 = vdwg.mxu0
  %627 = vmatpush.bf16.msra.mxu0 %v481
  %628 = vmatpush.bf16.msra.mxu0 %v480
  %629 = vmatpush.bf16.msra.mxu0 %v479
  %630 = vmatpush.bf16.msra.mxu0 %v478
  %631 = vmatpush.bf16.msra.mxu0 %v477
  %632 = vmatpush.bf16.msra.mxu0 %v476
  %633 = vmatpush.bf16.msra.mxu0 %v475
  %634 = vmatpush.bf16.msra.mxu0 %v474
  %635 = vmatmul.bf16.gmra.mxu0 %v167
  %v636 = vpop.f32.mrf.mxu0
  %v637 = vadd.f32 %v624, %v636
  %v638 = vpop.f32.mrf.mxu0
  %639 = vdwg.mxu0
  %640 = vmatpush.bf16.msra.mxu0 %v489
  %641 = vmatpush.bf16.msra.mxu0 %v488
  %642 = vmatpush.bf16.msra.mxu0 %v487
  %643 = vmatpush.bf16.msra.mxu0 %v486
  %644 = vmatpush.bf16.msra.mxu0 %v485
  %645 = vmatpush.bf16.msra.mxu0 %v484
  %646 = vmatpush.bf16.msra.mxu0 %v483
  %647 = vmatpush.bf16.msra.mxu0 %v482
  %648 = vmatmul.bf16.gmra.mxu0 %v168
  %v649 = vpop.f32.mrf.mxu0
  %v650 = vadd.f32 %v637, %v649
  %v651 = vpop.f32.mrf.mxu0
  %652 = vdwg.mxu0
  %653 = vmatpush.bf16.msra.mxu0 %v497
  %654 = vmatpush.bf16.msra.mxu0 %v496
  %655 = vmatpush.bf16.msra.mxu0 %v495
  %656 = vmatpush.bf16.msra.mxu0 %v494
  %657 = vmatpush.bf16.msra.mxu0 %v493
  %658 = vmatpush.bf16.msra.mxu0 %v492
  %659 = vmatpush.bf16.msra.mxu0 %v491
  %660 = vmatpush.bf16.msra.mxu0 %v490
  %661 = vmatmul.bf16.gmra.mxu0 %v169
  %v662 = vpop.f32.mrf.mxu0
  %v663 = vadd.f32 %v650, %v662
  %v664 = vpop.f32.mrf.mxu0
  %665 = vdwg.mxu0
  %v666 = vlaneseq
  %v667 = vand.u32 %v666, 127
  %v668 = vand.u32 2147483647, %v663
  %v669 = vsub.f32 0.0, %v668
  %v670 = vmul.f32 %v669, 1.442695
  %v671 = vpow.pop %v670
  %vm672 = vcmp.ge.f32.partialorder %v663, 0.0
  %v673 = vadd.f32 %v671, 1.0
  %v674 = vrcp.pop %v673
  %v675 = vmul.f32 %v673, %v674
  %v676 = vsub.f32 1.0, %v675
  %v677 = vmul.f32 %v674, %v676
  %v678 = vadd.f32 %v674, %v677
  %vm679 = vweird.f32 %v673
  %vm680 = vweird.f32 %v674
  %vm681 = vmor %vm679, %vm680
  %v682 = vsel %vm681, %v674, %v678
  %v683 = vand.u32 2147483647, %v673
  %vm684 = vcmp.eq.f32.partialorder %v683, 8.507059e+37
  %v685 = vand.u32 %v673, 2147483648
  %v686 = vor.u32 1.1754944e-38, %v685
  %v687 = vsel %vm684, %v686, %v682
  %v688 = vmul.f32 1.0, %v687
  %v689 = vmul.f32 %v671, %v687
  %v690 = vsel %vm672, %v688, %v689
  %vm691 = vcmp.ge.s32.totalorder %v667, 1
  %vm692 = vcmp.le.s32.totalorder %v667, 4
  %vm693 = vmand %vm691, %vm692
  %v694 = vsel %vm693, %v663, -inf
  %695 = vmax.xlane.f32.xlu0 %v694
  %v696 = vpop.xlane.xlu0 %695
  %v697 = vsub.f32 %v694, %v696
  %v698 = vmul.f32 %v697, 1.442695
  %v699 = vpow.pop %v698
  %700 = vadd.xlane.f32.xlu0 %v699
  %v701 = vpop.xlane.xlu0 %700
  %v702 = vlog2.pop %v701
  %v703 = vmul.f32 %v702, 0.6931472
  %v704 = vadd.f32 %v696, %v703
  %vm705 = vcmp.eq.s32.totalorder %v667, 0
  %v706 = vsub.f32 %v663, %v704
  %v707 = vsel %vm705, %v690, %v706
  %708 = vst [vmem:[%s3] sm:$0xff] %v707
  // Predicated region
  $region14: #{_discriminator_forward.7} parent=0 // pred_check
    _
  $region15: #{_discriminator_forward.7} parent=0 // pred_check_branch
    %710 = sbr.rel (0) target = $region17
  $region16: #{_discriminator_forward.7} parent=0 // pred_region
    _
  $region17: #{_discriminator_forward.7} parent=0 // pred_fallthru
    _
  // Predicated region
  $region18: #{_discriminator_forward.7} parent=0 // pred_check
    _
  $region19: #{_discriminator_forward.7} parent=0 // pred_check_branch
    %712 = sbr.rel (0) target = $region21
  $region20: #{_discriminator_forward.7} parent=0 // pred_region
    _
  $region21: #{_discriminator_forward.7} parent=0 // pred_fallthru
    _

</llo_original>
